<compile_context>
chip_gen: v6e
topology: v6e:2x2x1
jax: 0.10.0
libtpu: 0.0.40
codegen_flags: <defaults>
</compile_context>

<pallas_src>
import functools

import jax
import jax.numpy as jnp
from jax.experimental import pallas as pl
from jax.experimental.pallas import tpu as pltpu


def _round_up(x, m):
    return (x + m - 1) // m * m


def _conv_bn_relu_kernel(x_ref, w_ref, shift_ref, o_ref, *,
                         KH, KW, TH, W_cols, C_in, C_out_p):
    # x_ref:     (H_pad, W_pad_r, C_in)   one zero-padded image (batch squeezed), compute dtype
    # w_ref:     (KH, KW, C_in, C_out_p)  conv weight with BN scale folded in
    # shift_ref: (1, C_out_p)             folded BN shift (beta - mean*scale), f32
    # o_ref:     (TH, W_cols, C_out_p)    one aligned row-tile of the padded output
    r = pl.program_id(1)
    roff = pl.multiple_of(r * TH, TH)          # first padded row of this tile
    slab_h = TH + KH - 1
    # Rows needed by this row-tile: leading-dim dynamic slice (no relayout).
    slab = x_ref[pl.ds(roff, slab_h), :, :]    # (slab_h, W_pad_r, C_in)

    # f32 accumulator over the full tile width, seeded with the BN shift.
    # At TH=8, W_cols=16 this is (128, 128) f32 = 16 vregs -> stays in registers.
    acc = jnp.broadcast_to(shift_ref[0].astype(jnp.float32),
                           (TH * W_cols, C_out_p))
    for j in range(KW):
        # One sublane shift per W-tap; halo columns feed accumulator columns
        # that are discarded in the wrapper after the pallas_call.
        sl_j = slab[:, j:j + W_cols, :]                        # (slab_h, W_cols, C_in)
        for i in range(KH):
            # Leading-dim slice + layout-preserving flatten (W_cols % 8 == 0).
            lhs = sl_j[i:i + TH].reshape(TH * W_cols, C_in)
            acc = acc + jnp.dot(lhs, w_ref[i, j],
                                preferred_element_type=jnp.float32)
    # TODO(synk): for very small C_in the KH*KW taps could be folded into a
    # single MXU contraction (im2col along lanes); skipped because the lane
    # concat relayout costs about what it saves at these channel counts.

    y = jnp.maximum(acc, 0.0)                                  # shift already in acc
    o_ref[...] = y.reshape(TH, W_cols, C_out_p).astype(o_ref.dtype)


def basic_conv2d(x_nchw, weight, gamma, beta, running_mean, running_var, *,
                 stride=1, padding=0, eps=1e-3, compute_dtype=jnp.bfloat16):
    """BasicConv2d forward (eval-mode BN).  x_nchw: (N,C_in,H,W); weight: (C_out,C_in,KH,KW)."""
    assert stride == 1, "only stride=1 is supported"          # TODO(synk): strided conv
    N, C_in, H, W = x_nchw.shape
    C_out, C_in_w, KH, KW = weight.shape
    assert C_in == C_in_w, "grouped/dilated conv is not supported"

    H_out = H + 2 * padding - KH + 1
    W_out = W + 2 * padding - KW + 1
    assert H_out > 0 and W_out > 0

    # ---- tile sizing --------------------------------------------------------
    TH = 1
    for cand in (8, 4, 2, 1):                 # row tile: keep accumulator in regs,
        if H_out % cand == 0:                 # expose N*(H_out/TH) parallel steps
            TH = cand
            break
    W_cols = _round_up(W_out, 8)              # compute/store width (multiple of 8)
    W_pad_r = W_cols + (KW - 1)               # padded input width seen by kernel
    H_pad = H_out + (KH - 1)
    C_out_p = _round_up(C_out, 128)           # lane-dense / MXU-friendly channels

    # ---- plain-JAX glue: layout + padding + BN folding (XLA fuses these) ----
    # TODO(synk): in a full network keep activations NHWC (channels padded to
    # 128) end-to-end and fuse the zero padding into the kernel instead of an
    # NCHW<->NHWC transpose+pad HBM pass around every layer.
    x_nhwc = jnp.transpose(x_nchw, (0, 2, 3, 1))
    x_pad = jnp.pad(
        x_nhwc,
        ((0, 0),
         (padding, padding),
         (padding, W_pad_r - W - padding),    # extra right zeros only feed halo
         (0, 0))).astype(compute_dtype)       # halve activation DMA bytes (bf16)

    scale = gamma / jnp.sqrt(running_var + eps)                 # (C_out,)
    shift = beta - running_mean * scale                         # (C_out,)
    w_hwio = jnp.transpose(weight, (2, 3, 1, 0)) * scale        # fold BN scale
    w_p = jnp.pad(w_hwio, ((0, 0), (0, 0), (0, 0), (0, C_out_p - C_out)))
    w_p = w_p.astype(compute_dtype)
    shift_p = jnp.pad(shift, (0, C_out_p - C_out)).reshape(1, C_out_p)
    shift_p = shift_p.astype(jnp.float32)

    kernel = functools.partial(
        _conv_bn_relu_kernel, KH=KH, KW=KW, TH=TH, W_cols=W_cols,
        C_in=C_in, C_out_p=C_out_p)

    grid = (N, H_out // TH)
    out_padded = pl.pallas_call(
        kernel,
        out_shape=jax.ShapeDtypeStruct((N, H_out, W_cols, C_out_p), x_nchw.dtype),
        grid=grid,
        in_specs=[
            # Block index independent of r -> image DMA'd once, reused per row-tile.
            pl.BlockSpec((None, H_pad, W_pad_r, C_in), lambda n, r: (n, 0, 0, 0)),
            pl.BlockSpec((KH, KW, C_in, C_out_p), lambda n, r: (0, 0, 0, 0)),
            pl.BlockSpec((1, C_out_p), lambda n, r: (0, 0)),
        ],
        out_specs=pl.BlockSpec((None, TH, W_cols, C_out_p),
                               lambda n, r: (n, r, 0, 0)),
        compiler_params=pltpu.CompilerParams(
            dimension_semantics=("parallel", "parallel"),
            vmem_limit_bytes=64 * 1024 * 1024),
    )(x_pad, w_p, shift_p)

    out_nhwc = out_padded[:, :, :W_out, :C_out]      # drop halo cols + padded channels
    return jnp.transpose(out_nhwc, (0, 3, 1, 2))     # back to NCHW


def _reference(x, weight, gamma, beta, mean, var, *, padding, eps=1e-3):
    y = jax.lax.conv_general_dilated(
        x, weight, window_strides=(1, 1),
        padding=[(padding, padding), (padding, padding)],
        dimension_numbers=("NCHW", "OIHW", "NCHW"))
    scale = (gamma / jnp.sqrt(var + eps)).reshape(1, -1, 1, 1)
    shift = (beta - mean * gamma / jnp.sqrt(var + eps)).reshape(1, -1, 1, 1)
    return jnp.maximum(y * scale + shift, 0.0)


if __name__ == "__main__":
    key = jax.random.PRNGKey(0)
    k1, k2, k3, k4, k5, k6 = jax.random.split(key, 6)

    N, C_in, H, W = 2, 4, 16, 16
    C_out, KH, KW, padding = 8, 3, 3, 1

    x = jax.random.normal(k1, (N, C_in, H, W), jnp.float32)
    weight = jax.random.normal(k2, (C_out, C_in, KH, KW), jnp.float32) * 0.1
    gamma = 1.0 + 0.1 * jax.random.normal(k3, (C_out,), jnp.float32)
    beta = 0.1 * jax.random.normal(k4, (C_out,), jnp.float32)
    running_mean = 0.1 * jax.random.normal(k5, (C_out,), jnp.float32)
    running_var = jnp.abs(jax.random.normal(k6, (C_out,), jnp.float32)) + 0.5

    ref = _reference(x, weight, gamma, beta, running_mean, running_var,
                     padding=padding, eps=1e-3)

    # Default (fast) path: bf16 MXU operands, f32 accumulation -> compare to
    # the f32 reference with a bf16-level tolerance.
    out = basic_conv2d(x, weight, gamma, beta, running_mean, running_var,
                       padding=padding, eps=1e-3)
    out = jax.block_until_ready(out)
    assert out.shape == (N, C_out, H, W)
    assert jnp.allclose(out, ref, atol=2e-2, rtol=2e-2), \
        float(jnp.max(jnp.abs(out - ref)))

    # Exact-precision path: same kernel structure with f32 operands.
    out_f32 = basic_conv2d(x, weight, gamma, beta, running_mean, running_var,
                           padding=padding, eps=1e-3,
                           compute_dtype=jnp.float32)
    out_f32 = jax.block_until_ready(out_f32)
    assert jnp.allclose(out_f32, ref, atol=1e-4, rtol=1e-4), \
        float(jnp.max(jnp.abs(out_f32 - ref)))

    print("KERNEL_OK")
</pallas_src>

<mosaic_0001>
module attributes {stable_mosaic.version = 11 : i64} {
  func.func @_conv_bn_relu_kernel(%arg0: i32, %arg1: i32, %arg2: memref<1x18x18x4xbf16, #tpu.memory_space<vmem>>, %arg3: memref<3x3x4x128xbf16, #tpu.memory_space<vmem>>, %arg4: memref<1x128xf32, #tpu.memory_space<vmem>>, %arg5: memref<1x8x16x128xf32, #tpu.memory_space<vmem>>) attributes {dimension_semantics = [#tpu.dimension_semantics<parallel>, #tpu.dimension_semantics<parallel>], iteration_bounds = array<i64: 2, 2>, scalar_prefetch = 0 : i64, scratch_operands = 0 : i64, tpu.core_type = #tpu.core_type<tc>, window_params = [{transform_indices = @transform_0, window_bounds = array<i64: 1, 18, 18, 4>}, {pipeline_mode = #tpu.pipeline_mode<synchronous>, transform_indices = @transform_1, window_bounds = array<i64: 3, 3, 4, 128>}, {pipeline_mode = #tpu.pipeline_mode<synchronous>, transform_indices = @transform_2, window_bounds = array<i64: 1, 128>}, {transform_indices = @transform_3, window_bounds = array<i64: 1, 8, 16, 128>}]} {
    %c8_i32 = arith.constant 8 : i32
    %0 = arith.muli %arg1, %c8_i32 : i32
    %1 = tpu.assume_multiple %0, 8 : i32
    %c0 = arith.constant 0 : index
    %2 = arith.index_cast %1 : i32 to index
    %c0_0 = arith.constant 0 : index
    %c0_1 = arith.constant 0 : index
    %3 = vector.load %arg2[%c0, %2, %c0_0, %c0_1] : memref<1x18x18x4xbf16, #tpu.memory_space<vmem>>, vector<1x10x18x4xbf16>
    %4 = vector.shape_cast %3 : vector<1x10x18x4xbf16> to vector<10x18x4xbf16>
    %c0_2 = arith.constant 0 : index
    %c0_3 = arith.constant 0 : index
    %5 = vector.load %arg4[%c0_2, %c0_3] : memref<1x128xf32, #tpu.memory_space<vmem>>, vector<1x128xf32>
    %6 = vector.shape_cast %5 : vector<1x128xf32> to vector<128xf32>
    %7 = vector.shape_cast %6 : vector<128xf32> to vector<1x128xf32>
    %8 = vector.broadcast %7 : vector<1x128xf32> to vector<128x128xf32>
    %9 = vector.extract_strided_slice %4 {offsets = [0, 0, 0], sizes = [10, 16, 4], strides = [1, 1, 1]} : vector<10x18x4xbf16> to vector<10x16x4xbf16>
    %10 = vector.extract_strided_slice %9 {offsets = [0, 0, 0], sizes = [8, 16, 4], strides = [1, 1, 1]} : vector<10x16x4xbf16> to vector<8x16x4xbf16>
    %11 = vector.shape_cast %10 : vector<8x16x4xbf16> to vector<128x4xbf16>
    %c0_4 = arith.constant 0 : index
    %c0_5 = arith.constant 0 : index
    %c0_6 = arith.constant 0 : index
    %c0_7 = arith.constant 0 : index
    %12 = vector.load %arg3[%c0_4, %c0_5, %c0_6, %c0_7] : memref<3x3x4x128xbf16, #tpu.memory_space<vmem>>, vector<1x1x4x128xbf16>
    %13 = vector.shape_cast %12 : vector<1x1x4x128xbf16> to vector<4x128xbf16>
    %cst = arith.constant dense<0.000000e+00> : vector<128x128xf32>
    %14 = tpu.matmul %11, %13, %cst {dimension_numbers = #tpu.dot_dimension_numbers<[1], [0], [0], [1], [0, 0, 1, 1], [], []>} : vector<128x4xbf16>, vector<4x128xbf16>, vector<128x128xf32> -> vector<128x128xf32>
    %15 = arith.addf %8, %14 : vector<128x128xf32>
    %16 = vector.extract_strided_slice %9 {offsets = [1, 0, 0], sizes = [8, 16, 4], strides = [1, 1, 1]} : vector<10x16x4xbf16> to vector<8x16x4xbf16>
    %17 = vector.shape_cast %16 : vector<8x16x4xbf16> to vector<128x4xbf16>
    %c1 = arith.constant 1 : index
    %c0_8 = arith.constant 0 : index
    %c0_9 = arith.constant 0 : index
    %c0_10 = arith.constant 0 : index
    %18 = vector.load %arg3[%c1, %c0_8, %c0_9, %c0_10] : memref<3x3x4x128xbf16, #tpu.memory_space<vmem>>, vector<1x1x4x128xbf16>
    %19 = vector.shape_cast %18 : vector<1x1x4x128xbf16> to vector<4x128xbf16>
    %cst_11 = arith.constant dense<0.000000e+00> : vector<128x128xf32>
    %20 = tpu.matmul %17, %19, %cst_11 {dimension_numbers = #tpu.dot_dimension_numbers<[1], [0], [0], [1], [0, 0, 1, 1], [], []>} : vector<128x4xbf16>, vector<4x128xbf16>, vector<128x128xf32> -> vector<128x128xf32>
    %21 = arith.addf %15, %20 : vector<128x128xf32>
    %22 = vector.extract_strided_slice %9 {offsets = [2, 0, 0], sizes = [8, 16, 4], strides = [1, 1, 1]} : vector<10x16x4xbf16> to vector<8x16x4xbf16>
    %23 = vector.shape_cast %22 : vector<8x16x4xbf16> to vector<128x4xbf16>
    %c2 = arith.constant 2 : index
    %c0_12 = arith.constant 0 : index
    %c0_13 = arith.constant 0 : index
    %c0_14 = arith.constant 0 : index
    %24 = vector.load %arg3[%c2, %c0_12, %c0_13, %c0_14] : memref<3x3x4x128xbf16, #tpu.memory_space<vmem>>, vector<1x1x4x128xbf16>
    %25 = vector.shape_cast %24 : vector<1x1x4x128xbf16> to vector<4x128xbf16>
    %cst_15 = arith.constant dense<0.000000e+00> : vector<128x128xf32>
    %26 = tpu.matmul %23, %25, %cst_15 {dimension_numbers = #tpu.dot_dimension_numbers<[1], [0], [0], [1], [0, 0, 1, 1], [], []>} : vector<128x4xbf16>, vector<4x128xbf16>, vector<128x128xf32> -> vector<128x128xf32>
    %27 = arith.addf %21, %26 : vector<128x128xf32>
    %28 = vector.extract_strided_slice %4 {offsets = [0, 1, 0], sizes = [10, 16, 4], strides = [1, 1, 1]} : vector<10x18x4xbf16> to vector<10x16x4xbf16>
    %29 = vector.extract_strided_slice %28 {offsets = [0, 0, 0], sizes = [8, 16, 4], strides = [1, 1, 1]} : vector<10x16x4xbf16> to vector<8x16x4xbf16>
    %30 = vector.shape_cast %29 : vector<8x16x4xbf16> to vector<128x4xbf16>
    %c0_16 = arith.constant 0 : index
    %c1_17 = arith.constant 1 : index
    %c0_18 = arith.constant 0 : index
    %c0_19 = arith.constant 0 : index
    %31 = vector.load %arg3[%c0_16, %c1_17, %c0_18, %c0_19] : memref<3x3x4x128xbf16, #tpu.memory_space<vmem>>, vector<1x1x4x128xbf16>
    %32 = vector.shape_cast %31 : vector<1x1x4x128xbf16> to vector<4x128xbf16>
    %cst_20 = arith.constant dense<0.000000e+00> : vector<128x128xf32>
    %33 = tpu.matmul %30, %32, %cst_20 {dimension_numbers = #tpu.dot_dimension_numbers<[1], [0], [0], [1], [0, 0, 1, 1], [], []>} : vector<128x4xbf16>, vector<4x128xbf16>, vector<128x128xf32> -> vector<128x128xf32>
    %34 = arith.addf %27, %33 : vector<128x128xf32>
    %35 = vector.extract_strided_slice %28 {offsets = [1, 0, 0], sizes = [8, 16, 4], strides = [1, 1, 1]} : vector<10x16x4xbf16> to vector<8x16x4xbf16>
    %36 = vector.shape_cast %35 : vector<8x16x4xbf16> to vector<128x4xbf16>
    %c1_21 = arith.constant 1 : index
    %c1_22 = arith.constant 1 : index
    %c0_23 = arith.constant 0 : index
    %c0_24 = arith.constant 0 : index
    %37 = vector.load %arg3[%c1_21, %c1_22, %c0_23, %c0_24] : memref<3x3x4x128xbf16, #tpu.memory_space<vmem>>, vector<1x1x4x128xbf16>
    %38 = vector.shape_cast %37 : vector<1x1x4x128xbf16> to vector<4x128xbf16>
    %cst_25 = arith.constant dense<0.000000e+00> : vector<128x128xf32>
    %39 = tpu.matmul %36, %38, %cst_25 {dimension_numbers = #tpu.dot_dimension_numbers<[1], [0], [0], [1], [0, 0, 1, 1], [], []>} : vector<128x4xbf16>, vector<4x128xbf16>, vector<128x128xf32> -> vector<128x128xf32>
    %40 = arith.addf %34, %39 : vector<128x128xf32>
    %41 = vector.extract_strided_slice %28 {offsets = [2, 0, 0], sizes = [8, 16, 4], strides = [1, 1, 1]} : vector<10x16x4xbf16> to vector<8x16x4xbf16>
    %42 = vector.shape_cast %41 : vector<8x16x4xbf16> to vector<128x4xbf16>
    %c2_26 = arith.constant 2 : index
    %c1_27 = arith.constant 1 : index
    %c0_28 = arith.constant 0 : index
    %c0_29 = arith.constant 0 : index
    %43 = vector.load %arg3[%c2_26, %c1_27, %c0_28, %c0_29] : memref<3x3x4x128xbf16, #tpu.memory_space<vmem>>, vector<1x1x4x128xbf16>
    %44 = vector.shape_cast %43 : vector<1x1x4x128xbf16> to vector<4x128xbf16>
    %cst_30 = arith.constant dense<0.000000e+00> : vector<128x128xf32>
    %45 = tpu.matmul %42, %44, %cst_30 {dimension_numbers = #tpu.dot_dimension_numbers<[1], [0], [0], [1], [0, 0, 1, 1], [], []>} : vector<128x4xbf16>, vector<4x128xbf16>, vector<128x128xf32> -> vector<128x128xf32>
    %46 = arith.addf %40, %45 : vector<128x128xf32>
    %47 = vector.extract_strided_slice %4 {offsets = [0, 2, 0], sizes = [10, 16, 4], strides = [1, 1, 1]} : vector<10x18x4xbf16> to vector<10x16x4xbf16>
    %48 = vector.extract_strided_slice %47 {offsets = [0, 0, 0], sizes = [8, 16, 4], strides = [1, 1, 1]} : vector<10x16x4xbf16> to vector<8x16x4xbf16>
    %49 = vector.shape_cast %48 : vector<8x16x4xbf16> to vector<128x4xbf16>
    %c0_31 = arith.constant 0 : index
    %c2_32 = arith.constant 2 : index
    %c0_33 = arith.constant 0 : index
    %c0_34 = arith.constant 0 : index
    %50 = vector.load %arg3[%c0_31, %c2_32, %c0_33, %c0_34] : memref<3x3x4x128xbf16, #tpu.memory_space<vmem>>, vector<1x1x4x128xbf16>
    %51 = vector.shape_cast %50 : vector<1x1x4x128xbf16> to vector<4x128xbf16>
    %cst_35 = arith.constant dense<0.000000e+00> : vector<128x128xf32>
    %52 = tpu.matmul %49, %51, %cst_35 {dimension_numbers = #tpu.dot_dimension_numbers<[1], [0], [0], [1], [0, 0, 1, 1], [], []>} : vector<128x4xbf16>, vector<4x128xbf16>, vector<128x128xf32> -> vector<128x128xf32>
    %53 = arith.addf %46, %52 : vector<128x128xf32>
    %54 = vector.extract_strided_slice %47 {offsets = [1, 0, 0], sizes = [8, 16, 4], strides = [1, 1, 1]} : vector<10x16x4xbf16> to vector<8x16x4xbf16>
    %55 = vector.shape_cast %54 : vector<8x16x4xbf16> to vector<128x4xbf16>
    %c1_36 = arith.constant 1 : index
    %c2_37 = arith.constant 2 : index
    %c0_38 = arith.constant 0 : index
    %c0_39 = arith.constant 0 : index
    %56 = vector.load %arg3[%c1_36, %c2_37, %c0_38, %c0_39] : memref<3x3x4x128xbf16, #tpu.memory_space<vmem>>, vector<1x1x4x128xbf16>
    %57 = vector.shape_cast %56 : vector<1x1x4x128xbf16> to vector<4x128xbf16>
    %cst_40 = arith.constant dense<0.000000e+00> : vector<128x128xf32>
    %58 = tpu.matmul %55, %57, %cst_40 {dimension_numbers = #tpu.dot_dimension_numbers<[1], [0], [0], [1], [0, 0, 1, 1], [], []>} : vector<128x4xbf16>, vector<4x128xbf16>, vector<128x128xf32> -> vector<128x128xf32>
    %59 = arith.addf %53, %58 : vector<128x128xf32>
    %60 = vector.extract_strided_slice %47 {offsets = [2, 0, 0], sizes = [8, 16, 4], strides = [1, 1, 1]} : vector<10x16x4xbf16> to vector<8x16x4xbf16>
    %61 = vector.shape_cast %60 : vector<8x16x4xbf16> to vector<128x4xbf16>
    %c2_41 = arith.constant 2 : index
    %c2_42 = arith.constant 2 : index
    %c0_43 = arith.constant 0 : index
    %c0_44 = arith.constant 0 : index
    %62 = vector.load %arg3[%c2_41, %c2_42, %c0_43, %c0_44] : memref<3x3x4x128xbf16, #tpu.memory_space<vmem>>, vector<1x1x4x128xbf16>
    %63 = vector.shape_cast %62 : vector<1x1x4x128xbf16> to vector<4x128xbf16>
    %cst_45 = arith.constant dense<0.000000e+00> : vector<128x128xf32>
    %64 = tpu.matmul %61, %63, %cst_45 {dimension_numbers = #tpu.dot_dimension_numbers<[1], [0], [0], [1], [0, 0, 1, 1], [], []>} : vector<128x4xbf16>, vector<4x128xbf16>, vector<128x128xf32> -> vector<128x128xf32>
    %65 = arith.addf %59, %64 : vector<128x128xf32>
    %cst_46 = arith.constant 0.000000e+00 : f32
    %66 = vector.broadcast %cst_46 : f32 to vector<128x128xf32>
    %67 = arith.maximumf %65, %66 : vector<128x128xf32>
    %68 = vector.shape_cast %67 : vector<128x128xf32> to vector<8x16x128xf32>
    %c0_47 = arith.constant 0 : index
    %c0_48 = arith.constant 0 : index
    %c0_49 = arith.constant 0 : index
    %c0_50 = arith.constant 0 : index
    %69 = vector.load %arg5[%c0_47, %c0_48, %c0_49, %c0_50] : memref<1x8x16x128xf32, #tpu.memory_space<vmem>>, vector<1x8x16x128xf32>
    %70 = vector.shape_cast %69 : vector<1x8x16x128xf32> to vector<8x16x128xf32>
    %71 = vector.shape_cast %68 : vector<8x16x128xf32> to vector<1x8x16x128xf32>
    tpu.vector_store %arg5[%c0_47, %c0_48, %c0_49, %c0_50], %71 {strides = array<i32>} : memref<1x8x16x128xf32, #tpu.memory_space<vmem>>, vector<1x8x16x128xf32>,
    return
  }
  func.func @transform_0(%arg0: i32, %arg1: i32) -> (i32, i32, i32, i32) {
    %c0_i32 = arith.constant 0 : i32
    %c0_i32_0 = arith.constant 0 : i32
    %c0_i32_1 = arith.constant 0 : i32
    %c0_i32_2 = arith.constant 0 : i32
    return %arg0, %c0_i32, %c0_i32_0, %c0_i32_1 : i32, i32, i32, i32
  }
  func.func @transform_1(%arg0: i32, %arg1: i32) -> (i32, i32, i32, i32) {
    %c0_i32 = arith.constant 0 : i32
    %c0_i32_0 = arith.constant 0 : i32
    %c0_i32_1 = arith.constant 0 : i32
    %c0_i32_2 = arith.constant 0 : i32
    %c0_i32_3 = arith.constant 0 : i32
    return %c0_i32, %c0_i32_0, %c0_i32_1, %c0_i32_2 : i32, i32, i32, i32
  }
  func.func @transform_2(%arg0: i32, %arg1: i32) -> (i32, i32) {
    %c0_i32 = arith.constant 0 : i32
    %c0_i32_0 = arith.constant 0 : i32
    %c0_i32_1 = arith.constant 0 : i32
    return %c0_i32, %c0_i32_0 : i32, i32
  }
  func.func @transform_3(%arg0: i32, %arg1: i32) -> (i32, i32, i32, i32) {
    %c0_i32 = arith.constant 0 : i32
    %c0_i32_0 = arith.constant 0 : i32
    %c0_i32_1 = arith.constant 0 : i32
    return %arg0, %arg1, %c0_i32, %c0_i32_0 : i32, i32, i32, i32
  }
}

</mosaic_0001>

<llo_original>
// kernel: tpu_custom_call.1
$region0: #{tpu_custom_call.1}
  #allocation0 [shape = 'u32[]', space=smem, size = 0x4, offset = 0x4, fixed_abs, tag = 'smem constant byte address 0x4 - core index']
  #allocation1 [shape = 'u32[144,128]{1,0:T(1,128)}', space=vmem, size = 0x12000, scoped, tag = 'internal scratch']
  %s0 = inlined_call_operand.vmem [shape: bf16[2,18,18,4], index: 0, kind: input, shape index: {}]
  %s1 = inlined_call_operand.vmem [shape: bf16[3,3,4,128], index: 1, kind: input, shape index: {}]
  %s2 = inlined_call_operand.vmem [shape: f32[1,128], index: 2, kind: input, shape index: {}]
  %s3 = inlined_call_operand.hbm [shape: f32[2,16,16,128], index: 3, kind: output, shape index: {}]
  %s4 = sld [smem:[#allocation0]]
  $region45: #{tpu_custom_call.1} parent=0
    _
  %s6 = ssub.s32 1, %s4
  %s7 = scalar_select 0, %s6, %s4
  $region1: #{tpu_custom_call.1} parent=0
    #allocation2 [shape = 'u8[131072]{0}', space=vmem, size = 0x20000, scoped, tag = 'output window, operand 0']
    #allocation3 [shape = 's32[2]{0}', space=sflag, size = 0x8, scoped, tag = 'scoped memory for tpu_custom_call.1']
    %8 = vsyncpa [#allocation3], 0
    %s9 = scalar_lea.sflag [#allocation3], 1
    %10 = vsyncpa %s9, 0
    loop: start=0, step=1, limit=6
    $region2: #{tpu_custom_call.1} parent=1 // loop_pre_header
      _
    $region3: #{tpu_custom_call.1} parent=1 // loop_header
      %s12 = sphi 0, %s16
      %p13 = scmp.ge.s32.totalorder %s12, 6
      %s19 = sphi 0, %s31
      %s20 = sphi 0, %s27
      %s21 = sphi 0, %s19
      %s22 = sphi 0, %s20
      %s23 = sphi 0, %s21
      %s24 = sphi 0, %s22
      %s34 = sphi 0, %s36
      %s37 = sphi 0, %s34
      %s38 = sphi 0, %s37
      %s54 = sphi 0, %s38
      %s58 = sphi 0, %s58
      %s60 = sphi 0, %s58
      %s61 = sphi 0, %s60
      %s75 = sphi 0, %s61
      %s79 = sphi 0, %s79
      %s81 = sphi 0, %s79
      %s82 = sphi 0, %s81
      %s96 = sphi 0, %s82
      %s104 = sphi 0, %s106
      %s107 = sphi 0, %s104
      %s108 = sphi 0, %s107
      %s124 = sphi 0, %s108
    $region4: #{tpu_custom_call.1} parent=1 // loop_header_branch
      %15 = sbr.rel (%p13) target = $region8
    $region5: #{tpu_custom_call.1} parent=1 // loop_body
      %s17 = ssub.s32 %s12, 1
      %s18 = ssub.s32 %s12, 2
      %s25 = sadd.s32 1, %s20
      %p26 = scmp.ge.s32.totalorder %s25, 2
      %s27 = scalar_select %p26, 0, %s25
      %s28 = sadd.s32 1, %s19
      %s29 = scalar_select %p26, %s28, %s19
      %p30 = scmp.ge.s32.totalorder %s29, 2
      %s31 = scalar_select %p30, 0, %s29
      %s32 = ssub.s32 %s19, %s31
      %p33 = scmp.eq.s32.totalorder %s32, 0
      %s35 = sadd.s32 %s34, 1
      %s36 = scalar_select %p33, %s34, %s35
      %p39 = pneg %p33
      %p40 = scmp.eq.s32.totalorder %s12, 3
      %p41 = por %p39, %p40
      %p42 = scmp.ne.s32.totalorder %s34, %s37
      %p43 = scmp.eq.s32.totalorder %s12, 0
      %p44 = por %p42, %p43
      %p45 = scmp.ne.s32.totalorder %s34, %s37
      %p46 = scmp.eq.s32.totalorder %s17, 3
      %p47 = por %p45, %p46
      %p48 = scmp.ne.s32.totalorder %s37, %s38
      %p49 = scmp.eq.s32.totalorder %s17, 0
      %p50 = por %p48, %p49
      %p51 = scmp.ne.s32.totalorder %s37, %s38
      %p52 = scmp.eq.s32.totalorder %s18, 3
      %p53 = por %p51, %p52
      %p55 = scmp.ne.s32.totalorder %s38, %s54
      %p56 = scmp.eq.s32.totalorder %s18, 0
      %p57 = por %p55, %p56
      %s59 = sadd.s32 %s58, 1
      %p62 = scmp.eq.s32.totalorder %s12, 3
      %p63 = scmp.ne.s32.totalorder %s58, %s60
      %p64 = scmp.eq.s32.totalorder %s12, 0
      %p65 = por %p63, %p64
      %p66 = scmp.ne.s32.totalorder %s58, %s60
      %p67 = scmp.eq.s32.totalorder %s17, 3
      %p68 = por %p66, %p67
      %p69 = scmp.ne.s32.totalorder %s60, %s61
      %p70 = scmp.eq.s32.totalorder %s17, 0
      %p71 = por %p69, %p70
      %p72 = scmp.ne.s32.totalorder %s60, %s61
      %p73 = scmp.eq.s32.totalorder %s18, 3
      %p74 = por %p72, %p73
      %p76 = scmp.ne.s32.totalorder %s61, %s75
      %p77 = scmp.eq.s32.totalorder %s18, 0
      %p78 = por %p76, %p77
      %s80 = sadd.s32 %s79, 1
      %p83 = scmp.eq.s32.totalorder %s12, 3
      %p84 = scmp.ne.s32.totalorder %s79, %s81
      %p85 = scmp.eq.s32.totalorder %s12, 0
      %p86 = por %p84, %p85
      %p87 = scmp.ne.s32.totalorder %s79, %s81
      %p88 = scmp.eq.s32.totalorder %s17, 3
      %p89 = por %p87, %p88
      %p90 = scmp.ne.s32.totalorder %s81, %s82
      %p91 = scmp.eq.s32.totalorder %s17, 0
      %p92 = por %p90, %p91
      %p93 = scmp.ne.s32.totalorder %s81, %s82
      %p94 = scmp.eq.s32.totalorder %s18, 3
      %p95 = por %p93, %p94
      %p97 = scmp.ne.s32.totalorder %s82, %s96
      %p98 = scmp.eq.s32.totalorder %s18, 0
      %p99 = por %p97, %p98
      %s100 = ssub.s32 %s19, %s31
      %s101 = ssub.s32 %s20, %s27
      %s102 = sor.u32 %s100, %s101
      %p103 = scmp.eq.s32.totalorder %s102, 0
      %s105 = sadd.s32 %s104, 1
      %s106 = scalar_select %p103, %s104, %s105
      %p109 = pneg %p103
      %p110 = scmp.eq.s32.totalorder %s12, 3
      %p111 = por %p109, %p110
      %p112 = scmp.ne.s32.totalorder %s104, %s107
      %p113 = scmp.eq.s32.totalorder %s12, 0
      %p114 = por %p112, %p113
      %p115 = scmp.ne.s32.totalorder %s104, %s107
      %p116 = scmp.eq.s32.totalorder %s17, 3
      %p117 = por %p115, %p116
      %p118 = scmp.ne.s32.totalorder %s107, %s108
      %p119 = scmp.eq.s32.totalorder %s17, 0
      %p120 = por %p118, %p119
      %p121 = scmp.ne.s32.totalorder %s107, %s108
      %p122 = scmp.eq.s32.totalorder %s18, 3
      %p123 = por %p121, %p122
      %p125 = scmp.ne.s32.totalorder %s108, %s124
      %p126 = scmp.eq.s32.totalorder %s18, 0
      %p127 = por %p125, %p126
      %p128 = scmp.le.s32.totalorder 1, %s12
      %p129 = scmp.lt.s32.totalorder %s12, 5
      %p130 = pnand %p128, %p129
      %p131 = pneg %p130
      // Predicated region
      $region9: #{tpu_custom_call.1} parent=5 // pred_check
        _
      $region10: #{tpu_custom_call.1} parent=5 // pred_check_branch
        %133 = sbr.rel (%p130) target = $region12
      $region11: #{tpu_custom_call.1} parent=5 // pred_region
        %s134 = ssub.s32 %s12, 1
        // Predicated region
        $region13: #{tpu_custom_call.1} parent=11 // pred_check
          %p135 = pneg %p71
        $region14: #{tpu_custom_call.1} parent=11 // pred_check_branch
          %137 = sbr.rel (%p135) target = $region16
        $region15: #{tpu_custom_call.1} parent=11 // pred_region
          _
        $region16: #{tpu_custom_call.1} parent=11 // pred_fallthru
          _
        // Predicated region
        $region17: #{tpu_custom_call.1} parent=11 // pred_check
          %p138 = pneg %p92
        $region18: #{tpu_custom_call.1} parent=11 // pred_check_branch
          %140 = sbr.rel (%p138) target = $region20
        $region19: #{tpu_custom_call.1} parent=11 // pred_region
          _
        $region20: #{tpu_custom_call.1} parent=11 // pred_fallthru
          _
      $region12: #{tpu_custom_call.1} parent=5 // pred_fallthru
        _
      %p141 = scmp.lt.s32.totalorder %s12, 4
      // Predicated region
      $region21: #{tpu_custom_call.1} parent=5 // pred_check
        %p142 = pneg %p141
      $region22: #{tpu_custom_call.1} parent=5 // pred_check_branch
        %144 = sbr.rel (%p142) target = $region24
      $region23: #{tpu_custom_call.1} parent=5 // pred_region
        // Predicated region
        $region25: #{tpu_custom_call.1} parent=23 // pred_check
          %p145 = pneg %p44
        $region26: #{tpu_custom_call.1} parent=23 // pred_check_branch
          %147 = sbr.rel (%p145) target = $region28
        $region27: #{tpu_custom_call.1} parent=23 // pred_region
          %p148 = scmp.lt.s32.totalorder %s19, 1
          %s149 = scalar_select %p148, %s19, 1
          %s150 = smul.addr %s149, 54
          %s151 = smul.addr %s150, 4
          %s152 = scalar_lea.vmem %s0, %s151
        $region28: #{tpu_custom_call.1} parent=23 // pred_fallthru
          _
      $region24: #{tpu_custom_call.1} parent=5 // pred_fallthru
        _
      %p153 = scmp.le.s32.totalorder 1, %s12
      %p154 = scmp.lt.s32.totalorder %s12, 5
      %p155 = pnand %p153, %p154
      %p156 = pneg %p155
      // Predicated region
      $region29: #{tpu_custom_call.1} parent=5 // pred_check
        _
      $region30: #{tpu_custom_call.1} parent=5 // pred_check_branch
        %158 = sbr.rel (%p155) target = $region32
      $region31: #{tpu_custom_call.1} parent=5 // pred_region
        %s159 = ssub.s32 %s12, 1
        %p160 = scmp.lt.s32.totalorder %s21, 1
        %s161 = scalar_select %p160, %s21, 1
        %s162 = smul.addr %s161, 54
        %s163 = smul.addr %s162, 4
        %s164 = scalar_lea.vmem %s0, %s163
        %p165 = pneg %p50
        %p166 = pneg %p47
        %p167 = pneg %p71
        %p168 = pneg %p68
        %p169 = pneg %p92
        %p170 = pneg %p89
        %p171 = pneg %p120
        %p172 = pneg %p117
        %s173 = sand.u32 %s107, 1
        %s174 = scalar_lea.sflag [#allocation3], %s173
        %s175 = sand.u32 %s107, 1
        %s176 = smul.addr %s175, 128
        %s177 = scalar_lea.vmem [#allocation2], %s176
        %p178 = scmp.lt.s32.totalorder %s21, 1
        %s179 = scalar_select %p178, %s21, 1
        %s180 = smul.addr %s179, 54
        %s181 = smul.addr %s180, 4
        %s182 = scalar_lea.vmem %s0, %s181
        %s183 = smul.u32 8, %s22
        %s185 = smul.u32 %s22, 8
        %s186 = smul.u32 %s185, 3
        %s187 = smul.addr %s186, 4
        %s188 = scalar_lea.vmem %s182, %s187
        %v189 = vld [vmem:[%s188] sm:$0xf]
        %v190 = vld [vmem:[%s188 + $0x4] sm:$0xf]
        %v191 = vld [vmem:[%s188 + $0x8] sm:$0x1]
        %v192 = vld [vmem:[%s188 + $0xc] sm:$0xf]
        %v193 = vld [vmem:[%s188 + $0x10] sm:$0xf]
        %v194 = vld [vmem:[%s188 + $0x14] sm:$0x1]
        %v195 = vld [vmem:[%s188 + $0x18] sm:$0xf]
        %v196 = vld [vmem:[%s188 + $0x1c] sm:$0xf]
        %v197 = vld [vmem:[%s188 + $0x20] sm:$0x1]
        %v198 = vld [vmem:[%s188 + $0x24] sm:$0xf]
        %v199 = vld [vmem:[%s188 + $0x28] sm:$0xf]
        %v200 = vld [vmem:[%s188 + $0x2c] sm:$0x1]
        %v201 = vld [vmem:[%s188 + $0x30] sm:$0xf]
        %v202 = vld [vmem:[%s188 + $0x34] sm:$0xf]
        %v203 = vld [vmem:[%s188 + $0x38] sm:$0x1]
        %v204 = vld [vmem:[%s188 + $0x3c] sm:$0xf]
        %v205 = vld [vmem:[%s188 + $0x40] sm:$0xf]
        %v206 = vld [vmem:[%s188 + $0x44] sm:$0x1]
        %v207 = vld [vmem:[%s188 + $0x48] sm:$0xf]
        %v208 = vld [vmem:[%s188 + $0x4c] sm:$0xf]
        %v209 = vld [vmem:[%s188 + $0x50] sm:$0x1]
        %v210 = vld [vmem:[%s188 + $0x54] sm:$0xf]
        %v211 = vld [vmem:[%s188 + $0x58] sm:$0xf]
        %v212 = vld [vmem:[%s188 + $0x5c] sm:$0x1]
        %v213 = vld [vmem:[%s188 + $0x60] sm:$0xf]
        %v214 = vld [vmem:[%s188 + $0x64] sm:$0xf]
        %v215 = vld [vmem:[%s188 + $0x68] sm:$0x1]
        %v216 = vld [vmem:[%s188 + $0x6c] sm:$0xf]
        %v217 = vld [vmem:[%s188 + $0x70] sm:$0xf]
        %v218 = vld [vmem:[%s188 + $0x74] sm:$0x1]
        %v219 = vld [vmem:[%s2] sm:$0x1]
        %v221 = vlaneseq
        %v222 = vshrl.u32 %v221, 7
        %v223 = vsub.s32 0, %v222
        %v224 = vrot.slane %v219, %v223
        %v226 = vld [vmem:[%s1] sm:$0x3]
        %v243 = vunpack.c.l.b16 %v189
        %v244 = vunpack.c.l.b16 %v190
        %v245 = vunpack.c.l.b16 %v192
        %v246 = vunpack.c.l.b16 %v193
        %v247 = vunpack.c.l.b16 %v195
        %v248 = vunpack.c.l.b16 %v196
        %v249 = vunpack.c.l.b16 %v198
        %v250 = vunpack.c.l.b16 %v199
        %v251 = vunpack.c.l.b16 %v201
        %v252 = vunpack.c.l.b16 %v202
        %v253 = vunpack.c.l.b16 %v204
        %v254 = vunpack.c.l.b16 %v205
        %v255 = vunpack.c.l.b16 %v207
        %v256 = vunpack.c.l.b16 %v208
        %v257 = vunpack.c.l.b16 %v210
        %v258 = vunpack.c.l.b16 %v211
        %v259 = vpack.c.b16 %v244, %v243
        %v260 = vpack.c.b16 %v246, %v245
        %v261 = vpack.c.b16 %v248, %v247
        %v262 = vpack.c.b16 %v250, %v249
        %v263 = vpack.c.b16 %v252, %v251
        %v264 = vpack.c.b16 %v254, %v253
        %v265 = vpack.c.b16 %v256, %v255
        %v266 = vpack.c.b16 %v258, %v257
        %vm267 = vcmask 31744
        %v269 = vsel %vm267, %v259, 0
        %v272 = vsel %vm267, %v260, 0
        %v275 = vsel %vm267, %v261, 0
        %v278 = vsel %vm267, %v262, 0
        %v281 = vsel %vm267, %v263, 0
        %v284 = vsel %vm267, %v264, 0
        %v287 = vsel %vm267, %v265, 0
        %v290 = vsel %vm267, %v266, 0
        %vm292 = vcmask 1041408
        %v294 = vsel %vm292, %v226, 0
        %296 = vmatprep.subr.bf16.mxu0 0
        %297 = vmatpush1.bf16.msra.mxu0 0
        %298 = vmatprep.subr.bf16.mxu0 0
        %299 = vmatpush1.bf16.msra.mxu0 0
        %300 = vmatprep.subr.bf16.mxu0 0
        %301 = vmatpush1.bf16.msra.mxu0 0
        %302 = vmatprep.subr.bf16.mxu0 0
        %303 = vmatpush1.bf16.msra.mxu0 0
        %304 = vmatprep.subr.bf16.mxu0 0
        %305 = vmatpush1.bf16.msra.mxu0 0
        %306 = vmatprep.subr.bf16.mxu0 0
        %307 = vmatpush1.bf16.msra.mxu0 0
        %308 = vmatprep.subr.bf16.mxu0 0
        %309 = vmatpush1.bf16.msra.mxu0 0
        %310 = vmatprep.subr.bf16.mxu0 0
        %311 = vmatpush1.bf16.msra.mxu0 %v294
        %312 = vmatprep.subr.bf16.mxu0 0
        %313 = vmatpush2.bf16.msra.mxu0 0
        %314 = vmatprep.subr.bf16.mxu0 0
        %315 = vmatpush2.bf16.msra.mxu0 0
        %316 = vmatprep.subr.bf16.mxu0 0
        %317 = vmatpush2.bf16.msra.mxu0 0
        %318 = vmatprep.subr.bf16.mxu0 0
        %319 = vmatpush2.bf16.msra.mxu0 0
        %320 = vmatprep.subr.bf16.mxu0 0
        %321 = vmatpush2.bf16.msra.mxu0 0
        %322 = vmatprep.subr.bf16.mxu0 0
        %323 = vmatpush2.bf16.msra.mxu0 0
        %324 = vmatprep.subr.bf16.mxu0 0
        %325 = vmatpush2.bf16.msra.mxu0 0
        %326 = vmatprep.subr.bf16.mxu0 0
        %327 = vmatpush2.bf16.msra.mxu0 0
        %328 = vmatprep.mubr.bf16.mxu0 0
        %329 = vmatmul.mubr.bf16.gmra.mxu0 %v269
        %v330 = vpop.f32.mrf.mxu0
        %v331 = vadd.f32 0.0, %v330
        %v332 = vpop.f32.mrf.mxu0
        %v333 = vpop.f32.mrf.mxu0
        %v334 = vadd.f32 0.0, %v333
        %v335 = vpop.f32.mrf.mxu0
        %336 = vmatprep.mubr.bf16.mxu0 0
        %337 = vmatmul.mubr.bf16.gmra.mxu0 %v272
        %v338 = vpop.f32.mrf.mxu0
        %v339 = vadd.f32 0.0, %v338
        %v340 = vpop.f32.mrf.mxu0
        %v341 = vpop.f32.mrf.mxu0
        %v342 = vadd.f32 0.0, %v341
        %v343 = vpop.f32.mrf.mxu0
        %344 = vmatprep.mubr.bf16.mxu0 0
        %345 = vmatmul.mubr.bf16.gmra.mxu0 %v275
        %v346 = vpop.f32.mrf.mxu0
        %v347 = vadd.f32 0.0, %v346
        %v348 = vpop.f32.mrf.mxu0
        %v349 = vpop.f32.mrf.mxu0
        %v350 = vadd.f32 0.0, %v349
        %v351 = vpop.f32.mrf.mxu0
        %352 = vmatprep.mubr.bf16.mxu0 0
        %353 = vmatmul.mubr.bf16.gmra.mxu0 %v278
        %v354 = vpop.f32.mrf.mxu0
        %v355 = vadd.f32 0.0, %v354
        %v356 = vpop.f32.mrf.mxu0
        %v357 = vpop.f32.mrf.mxu0
        %v358 = vadd.f32 0.0, %v357
        %v359 = vpop.f32.mrf.mxu0
        %360 = vmatprep.mubr.bf16.mxu0 0
        %361 = vmatmul.mubr.bf16.gmra.mxu0 %v281
        %v362 = vpop.f32.mrf.mxu0
        %v363 = vadd.f32 0.0, %v362
        %v364 = vpop.f32.mrf.mxu0
        %v365 = vpop.f32.mrf.mxu0
        %v366 = vadd.f32 0.0, %v365
        %v367 = vpop.f32.mrf.mxu0
        %368 = vmatprep.mubr.bf16.mxu0 0
        %369 = vmatmul.mubr.bf16.gmra.mxu0 %v284
        %v370 = vpop.f32.mrf.mxu0
        %v371 = vadd.f32 0.0, %v370
        %v372 = vpop.f32.mrf.mxu0
        %v373 = vpop.f32.mrf.mxu0
        %v374 = vadd.f32 0.0, %v373
        %v375 = vpop.f32.mrf.mxu0
        %376 = vmatprep.mubr.bf16.mxu0 0
        %377 = vmatmul.mubr.bf16.gmra.mxu0 %v287
        %v378 = vpop.f32.mrf.mxu0
        %v379 = vadd.f32 0.0, %v378
        %v380 = vpop.f32.mrf.mxu0
        %v381 = vpop.f32.mrf.mxu0
        %v382 = vadd.f32 0.0, %v381
        %v383 = vpop.f32.mrf.mxu0
        %384 = vmatprep.mubr.bf16.mxu0 0
        %385 = vmatmul.mubr.bf16.gmra.mxu0 %v290
        %v386 = vpop.f32.mrf.mxu0
        %v387 = vadd.f32 0.0, %v386
        %v388 = vpop.f32.mrf.mxu0
        %v389 = vpop.f32.mrf.mxu0
        %v390 = vadd.f32 0.0, %v389
        %v391 = vpop.f32.mrf.mxu0
        %392 = vdwg.mxu0
        %v393 = vadd.f32 %v224, %v331
        %v394 = vadd.f32 %v224, %v334
        %v395 = vadd.f32 %v224, %v339
        %v396 = vadd.f32 %v224, %v342
        %v397 = vadd.f32 %v224, %v347
        %v398 = vadd.f32 %v224, %v350
        %v399 = vadd.f32 %v224, %v355
        %v400 = vadd.f32 %v224, %v358
        %v401 = vadd.f32 %v224, %v363
        %v402 = vadd.f32 %v224, %v366
        %v403 = vadd.f32 %v224, %v371
        %v404 = vadd.f32 %v224, %v374
        %v405 = vadd.f32 %v224, %v379
        %v406 = vadd.f32 %v224, %v382
        %v407 = vadd.f32 %v224, %v387
        %v408 = vadd.f32 %v224, %v390
        %s409 = scalar_lea.vmem %s1, 6
        %v410 = vld [vmem:[%s409] sm:$0x3]
        %v413 = vunpack.c.l.b16 %v213
        %v414 = vunpack.c.l.b16 %v214
        %v415 = vpack.c.b16 %v414, %v413
        %v417 = vsel %vm267, %v415, 0
        %v420 = vsel %vm292, %v410, 0
        %422 = vmatprep.subr.bf16.mxu0 0
        %423 = vmatpush1.bf16.msra.mxu0 0
        %424 = vmatprep.subr.bf16.mxu0 0
        %425 = vmatpush1.bf16.msra.mxu0 0
        %426 = vmatprep.subr.bf16.mxu0 0
        %427 = vmatpush1.bf16.msra.mxu0 0
        %428 = vmatprep.subr.bf16.mxu0 0
        %429 = vmatpush1.bf16.msra.mxu0 0
        %430 = vmatprep.subr.bf16.mxu0 0
        %431 = vmatpush1.bf16.msra.mxu0 0
        %432 = vmatprep.subr.bf16.mxu0 0
        %433 = vmatpush1.bf16.msra.mxu0 0
        %434 = vmatprep.subr.bf16.mxu0 0
        %435 = vmatpush1.bf16.msra.mxu0 0
        %436 = vmatprep.subr.bf16.mxu0 0
        %437 = vmatpush1.bf16.msra.mxu0 %v420
        %438 = vmatprep.subr.bf16.mxu0 0
        %439 = vmatpush2.bf16.msra.mxu0 0
        %440 = vmatprep.subr.bf16.mxu0 0
        %441 = vmatpush2.bf16.msra.mxu0 0
        %442 = vmatprep.subr.bf16.mxu0 0
        %443 = vmatpush2.bf16.msra.mxu0 0
        %444 = vmatprep.subr.bf16.mxu0 0
        %445 = vmatpush2.bf16.msra.mxu0 0
        %446 = vmatprep.subr.bf16.mxu0 0
        %447 = vmatpush2.bf16.msra.mxu0 0
        %448 = vmatprep.subr.bf16.mxu0 0
        %449 = vmatpush2.bf16.msra.mxu0 0
        %450 = vmatprep.subr.bf16.mxu0 0
        %451 = vmatpush2.bf16.msra.mxu0 0
        %452 = vmatprep.subr.bf16.mxu0 0
        %453 = vmatpush2.bf16.msra.mxu0 0
        %454 = vmatprep.mubr.bf16.mxu0 0
        %455 = vmatmul.mubr.bf16.gmra.mxu0 %v272
        %v456 = vpop.f32.mrf.mxu0
        %v457 = vadd.f32 0.0, %v456
        %v458 = vpop.f32.mrf.mxu0
        %v459 = vpop.f32.mrf.mxu0
        %v460 = vadd.f32 0.0, %v459
        %v461 = vpop.f32.mrf.mxu0
        %462 = vmatprep.mubr.bf16.mxu0 0
        %463 = vmatmul.mubr.bf16.gmra.mxu0 %v275
        %v464 = vpop.f32.mrf.mxu0
        %v465 = vadd.f32 0.0, %v464
        %v466 = vpop.f32.mrf.mxu0
        %v467 = vpop.f32.mrf.mxu0
        %v468 = vadd.f32 0.0, %v467
        %v469 = vpop.f32.mrf.mxu0
        %470 = vmatprep.mubr.bf16.mxu0 0
        %471 = vmatmul.mubr.bf16.gmra.mxu0 %v278
        %v472 = vpop.f32.mrf.mxu0
        %v473 = vadd.f32 0.0, %v472
        %v474 = vpop.f32.mrf.mxu0
        %v475 = vpop.f32.mrf.mxu0
        %v476 = vadd.f32 0.0, %v475
        %v477 = vpop.f32.mrf.mxu0
        %478 = vmatprep.mubr.bf16.mxu0 0
        %479 = vmatmul.mubr.bf16.gmra.mxu0 %v281
        %v480 = vpop.f32.mrf.mxu0
        %v481 = vadd.f32 0.0, %v480
        %v482 = vpop.f32.mrf.mxu0
        %v483 = vpop.f32.mrf.mxu0
        %v484 = vadd.f32 0.0, %v483
        %v485 = vpop.f32.mrf.mxu0
        %486 = vmatprep.mubr.bf16.mxu0 0
        %487 = vmatmul.mubr.bf16.gmra.mxu0 %v284
        %v488 = vpop.f32.mrf.mxu0
        %v489 = vadd.f32 0.0, %v488
        %v490 = vpop.f32.mrf.mxu0
        %v491 = vpop.f32.mrf.mxu0
        %v492 = vadd.f32 0.0, %v491
        %v493 = vpop.f32.mrf.mxu0
        %494 = vmatprep.mubr.bf16.mxu0 0
        %495 = vmatmul.mubr.bf16.gmra.mxu0 %v287
        %v496 = vpop.f32.mrf.mxu0
        %v497 = vadd.f32 0.0, %v496
        %v498 = vpop.f32.mrf.mxu0
        %v499 = vpop.f32.mrf.mxu0
        %v500 = vadd.f32 0.0, %v499
        %v501 = vpop.f32.mrf.mxu0
        %502 = vmatprep.mubr.bf16.mxu0 0
        %503 = vmatmul.mubr.bf16.gmra.mxu0 %v290
        %v504 = vpop.f32.mrf.mxu0
        %v505 = vadd.f32 0.0, %v504
        %v506 = vpop.f32.mrf.mxu0
        %v507 = vpop.f32.mrf.mxu0
        %v508 = vadd.f32 0.0, %v507
        %v509 = vpop.f32.mrf.mxu0
        %510 = vmatprep.mubr.bf16.mxu0 0
        %511 = vmatmul.mubr.bf16.gmra.mxu0 %v417
        %v512 = vpop.f32.mrf.mxu0
        %v513 = vadd.f32 0.0, %v512
        %v514 = vpop.f32.mrf.mxu0
        %v515 = vpop.f32.mrf.mxu0
        %v516 = vadd.f32 0.0, %v515
        %v517 = vpop.f32.mrf.mxu0
        %518 = vdwg.mxu0
        %v519 = vadd.f32 %v393, %v457
        %v520 = vadd.f32 %v394, %v460
        %v521 = vadd.f32 %v395, %v465
        %v522 = vadd.f32 %v396, %v468
        %v523 = vadd.f32 %v397, %v473
        %v524 = vadd.f32 %v398, %v476
        %v525 = vadd.f32 %v399, %v481
        %v526 = vadd.f32 %v400, %v484
        %v527 = vadd.f32 %v401, %v489
        %v528 = vadd.f32 %v402, %v492
        %v529 = vadd.f32 %v403, %v497
        %v530 = vadd.f32 %v404, %v500
        %v531 = vadd.f32 %v405, %v505
        %v532 = vadd.f32 %v406, %v508
        %v533 = vadd.f32 %v407, %v513
        %v534 = vadd.f32 %v408, %v516
        %s535 = scalar_lea.vmem %s1, 12
        %v536 = vld [vmem:[%s535] sm:$0x3]
        %v539 = vunpack.c.l.b16 %v216
        %v540 = vunpack.c.l.b16 %v217
        %v541 = vpack.c.b16 %v540, %v539
        %v543 = vsel %vm267, %v541, 0
        %v546 = vsel %vm292, %v536, 0
        %548 = vmatprep.subr.bf16.mxu0 0
        %549 = vmatpush1.bf16.msra.mxu0 0
        %550 = vmatprep.subr.bf16.mxu0 0
        %551 = vmatpush1.bf16.msra.mxu0 0
        %552 = vmatprep.subr.bf16.mxu0 0
        %553 = vmatpush1.bf16.msra.mxu0 0
        %554 = vmatprep.subr.bf16.mxu0 0
        %555 = vmatpush1.bf16.msra.mxu0 0
        %556 = vmatprep.subr.bf16.mxu0 0
        %557 = vmatpush1.bf16.msra.mxu0 0
        %558 = vmatprep.subr.bf16.mxu0 0
        %559 = vmatpush1.bf16.msra.mxu0 0
        %560 = vmatprep.subr.bf16.mxu0 0
        %561 = vmatpush1.bf16.msra.mxu0 0
        %562 = vmatprep.subr.bf16.mxu0 0
        %563 = vmatpush1.bf16.msra.mxu0 %v546
        %564 = vmatprep.subr.bf16.mxu0 0
        %565 = vmatpush2.bf16.msra.mxu0 0
        %566 = vmatprep.subr.bf16.mxu0 0
        %567 = vmatpush2.bf16.msra.mxu0 0
        %568 = vmatprep.subr.bf16.mxu0 0
        %569 = vmatpush2.bf16.msra.mxu0 0
        %570 = vmatprep.subr.bf16.mxu0 0
        %571 = vmatpush2.bf16.msra.mxu0 0
        %572 = vmatprep.subr.bf16.mxu0 0
        %573 = vmatpush2.bf16.msra.mxu0 0
        %574 = vmatprep.subr.bf16.mxu0 0
        %575 = vmatpush2.bf16.msra.mxu0 0
        %576 = vmatprep.subr.bf16.mxu0 0
        %577 = vmatpush2.bf16.msra.mxu0 0
        %578 = vmatprep.subr.bf16.mxu0 0
        %579 = vmatpush2.bf16.msra.mxu0 0
        %580 = vmatprep.mubr.bf16.mxu0 0
        %581 = vmatmul.mubr.bf16.gmra.mxu0 %v275
        %v582 = vpop.f32.mrf.mxu0
        %v583 = vadd.f32 0.0, %v582
        %v584 = vpop.f32.mrf.mxu0
        %v585 = vpop.f32.mrf.mxu0
        %v586 = vadd.f32 0.0, %v585
        %v587 = vpop.f32.mrf.mxu0
        %588 = vmatprep.mubr.bf16.mxu0 0
        %589 = vmatmul.mubr.bf16.gmra.mxu0 %v278
        %v590 = vpop.f32.mrf.mxu0
        %v591 = vadd.f32 0.0, %v590
        %v592 = vpop.f32.mrf.mxu0
        %v593 = vpop.f32.mrf.mxu0
        %v594 = vadd.f32 0.0, %v593
        %v595 = vpop.f32.mrf.mxu0
        %596 = vmatprep.mubr.bf16.mxu0 0
        %597 = vmatmul.mubr.bf16.gmra.mxu0 %v281
        %v598 = vpop.f32.mrf.mxu0
        %v599 = vadd.f32 0.0, %v598
        %v600 = vpop.f32.mrf.mxu0
        %v601 = vpop.f32.mrf.mxu0
        %v602 = vadd.f32 0.0, %v601
        %v603 = vpop.f32.mrf.mxu0
        %604 = vmatprep.mubr.bf16.mxu0 0
        %605 = vmatmul.mubr.bf16.gmra.mxu0 %v284
        %v606 = vpop.f32.mrf.mxu0
        %v607 = vadd.f32 0.0, %v606
        %v608 = vpop.f32.mrf.mxu0
        %v609 = vpop.f32.mrf.mxu0
        %v610 = vadd.f32 0.0, %v609
        %v611 = vpop.f32.mrf.mxu0
        %612 = vmatprep.mubr.bf16.mxu0 0
        %613 = vmatmul.mubr.bf16.gmra.mxu0 %v287
        %v614 = vpop.f32.mrf.mxu0
        %v615 = vadd.f32 0.0, %v614
        %v616 = vpop.f32.mrf.mxu0
        %v617 = vpop.f32.mrf.mxu0
        %v618 = vadd.f32 0.0, %v617
        %v619 = vpop.f32.mrf.mxu0
        %620 = vmatprep.mubr.bf16.mxu0 0
        %621 = vmatmul.mubr.bf16.gmra.mxu0 %v290
        %v622 = vpop.f32.mrf.mxu0
        %v623 = vadd.f32 0.0, %v622
        %v624 = vpop.f32.mrf.mxu0
        %v625 = vpop.f32.mrf.mxu0
        %v626 = vadd.f32 0.0, %v625
        %v627 = vpop.f32.mrf.mxu0
        %628 = vmatprep.mubr.bf16.mxu0 0
        %629 = vmatmul.mubr.bf16.gmra.mxu0 %v417
        %v630 = vpop.f32.mrf.mxu0
        %v631 = vadd.f32 0.0, %v630
        %v632 = vpop.f32.mrf.mxu0
        %v633 = vpop.f32.mrf.mxu0
        %v634 = vadd.f32 0.0, %v633
        %v635 = vpop.f32.mrf.mxu0
        %636 = vmatprep.mubr.bf16.mxu0 0
        %637 = vmatmul.mubr.bf16.gmra.mxu0 %v543
        %v638 = vpop.f32.mrf.mxu0
        %v639 = vadd.f32 0.0, %v638
        %v640 = vpop.f32.mrf.mxu0
        %v641 = vpop.f32.mrf.mxu0
        %v642 = vadd.f32 0.0, %v641
        %v643 = vpop.f32.mrf.mxu0
        %644 = vdwg.mxu0
        %v645 = vadd.f32 %v519, %v583
        %v646 = vadd.f32 %v520, %v586
        %v647 = vadd.f32 %v521, %v591
        %v648 = vadd.f32 %v522, %v594
        %v649 = vadd.f32 %v523, %v599
        %v650 = vadd.f32 %v524, %v602
        %v651 = vadd.f32 %v525, %v607
        %v652 = vadd.f32 %v526, %v610
        %v653 = vadd.f32 %v527, %v615
        %v654 = vadd.f32 %v528, %v618
        %v655 = vadd.f32 %v529, %v623
        %v656 = vadd.f32 %v530, %v626
        %v657 = vadd.f32 %v531, %v631
        %v658 = vadd.f32 %v532, %v634
        %v659 = vadd.f32 %v533, %v639
        %v660 = vadd.f32 %v534, %v642
        %vm661 = vsmask.f32 3328
        %vm662 = vsmask.f32 7440
        %vm663 = vmor %vm661, %vm662
        %v665 = vshrl.u32 %v189, 16
        %v667 = vrot.slane %v665, 4
        %v668 = vshll.u32 %v189, 16
        %v670 = vrot.slane %v668, 5
        %v671 = vor.u32 %v667, %v670
        %v672 = vrot.slane %v671, 4
        %v674 = vshll.u32 %v190, 16
        %v676 = vrot.slane %v674, 5
        %v677 = vsel %vm663, %v672, %v676
        %v678 = vshrl.u32 %v190, 16
        %v680 = vrot.slane %v678, 4
        %v681 = vor.u32 %v680, %v676
        %v682 = vrot.slane %v681, 4
        %v684 = vshll.u32 %v191, 16
        %v686 = vrot.slane %v684, 5
        %v687 = vsel %vm663, %v682, %v686
        %v689 = vshrl.u32 %v192, 16
        %v691 = vrot.slane %v689, 4
        %v692 = vshll.u32 %v192, 16
        %v694 = vrot.slane %v692, 5
        %v695 = vor.u32 %v691, %v694
        %v696 = vrot.slane %v695, 4
        %v698 = vshll.u32 %v193, 16
        %v700 = vrot.slane %v698, 5
        %v701 = vsel %vm663, %v696, %v700
        %v702 = vshrl.u32 %v193, 16
        %v704 = vrot.slane %v702, 4
        %v705 = vor.u32 %v704, %v700
        %v706 = vrot.slane %v705, 4
        %v708 = vshll.u32 %v194, 16
        %v710 = vrot.slane %v708, 5
        %v711 = vsel %vm663, %v706, %v710
        %v713 = vshrl.u32 %v195, 16
        %v715 = vrot.slane %v713, 4
        %v716 = vshll.u32 %v195, 16
        %v718 = vrot.slane %v716, 5
        %v719 = vor.u32 %v715, %v718
        %v720 = vrot.slane %v719, 4
        %v722 = vshll.u32 %v196, 16
        %v724 = vrot.slane %v722, 5
        %v725 = vsel %vm663, %v720, %v724
        %v726 = vshrl.u32 %v196, 16
        %v728 = vrot.slane %v726, 4
        %v729 = vor.u32 %v728, %v724
        %v730 = vrot.slane %v729, 4
        %v732 = vshll.u32 %v197, 16
        %v734 = vrot.slane %v732, 5
        %v735 = vsel %vm663, %v730, %v734
        %v737 = vshrl.u32 %v198, 16
        %v739 = vrot.slane %v737, 4
        %v740 = vshll.u32 %v198, 16
        %v742 = vrot.slane %v740, 5
        %v743 = vor.u32 %v739, %v742
        %v744 = vrot.slane %v743, 4
        %v746 = vshll.u32 %v199, 16
        %v748 = vrot.slane %v746, 5
        %v749 = vsel %vm663, %v744, %v748
        %v750 = vshrl.u32 %v199, 16
        %v752 = vrot.slane %v750, 4
        %v753 = vor.u32 %v752, %v748
        %v754 = vrot.slane %v753, 4
        %v756 = vshll.u32 %v200, 16
        %v758 = vrot.slane %v756, 5
        %v759 = vsel %vm663, %v754, %v758
        %v761 = vshrl.u32 %v201, 16
        %v763 = vrot.slane %v761, 4
        %v764 = vshll.u32 %v201, 16
        %v766 = vrot.slane %v764, 5
        %v767 = vor.u32 %v763, %v766
        %v768 = vrot.slane %v767, 4
        %v770 = vshll.u32 %v202, 16
        %v772 = vrot.slane %v770, 5
        %v773 = vsel %vm663, %v768, %v772
        %v774 = vshrl.u32 %v202, 16
        %v776 = vrot.slane %v774, 4
        %v777 = vor.u32 %v776, %v772
        %v778 = vrot.slane %v777, 4
        %v780 = vshll.u32 %v203, 16
        %v782 = vrot.slane %v780, 5
        %v783 = vsel %vm663, %v778, %v782
        %v785 = vshrl.u32 %v204, 16
        %v787 = vrot.slane %v785, 4
        %v788 = vshll.u32 %v204, 16
        %v790 = vrot.slane %v788, 5
        %v791 = vor.u32 %v787, %v790
        %v792 = vrot.slane %v791, 4
        %v794 = vshll.u32 %v205, 16
        %v796 = vrot.slane %v794, 5
        %v797 = vsel %vm663, %v792, %v796
        %v798 = vshrl.u32 %v205, 16
        %v800 = vrot.slane %v798, 4
        %v801 = vor.u32 %v800, %v796
        %v802 = vrot.slane %v801, 4
        %v804 = vshll.u32 %v206, 16
        %v806 = vrot.slane %v804, 5
        %v807 = vsel %vm663, %v802, %v806
        %v809 = vshrl.u32 %v207, 16
        %v811 = vrot.slane %v809, 4
        %v812 = vshll.u32 %v207, 16
        %v814 = vrot.slane %v812, 5
        %v815 = vor.u32 %v811, %v814
        %v816 = vrot.slane %v815, 4
        %v818 = vshll.u32 %v208, 16
        %v820 = vrot.slane %v818, 5
        %v821 = vsel %vm663, %v816, %v820
        %v822 = vshrl.u32 %v208, 16
        %v824 = vrot.slane %v822, 4
        %v825 = vor.u32 %v824, %v820
        %v826 = vrot.slane %v825, 4
        %v828 = vshll.u32 %v209, 16
        %v830 = vrot.slane %v828, 5
        %v831 = vsel %vm663, %v826, %v830
        %v833 = vshrl.u32 %v210, 16
        %v835 = vrot.slane %v833, 4
        %v836 = vshll.u32 %v210, 16
        %v838 = vrot.slane %v836, 5
        %v839 = vor.u32 %v835, %v838
        %v840 = vrot.slane %v839, 4
        %v842 = vshll.u32 %v211, 16
        %v844 = vrot.slane %v842, 5
        %v845 = vsel %vm663, %v840, %v844
        %v846 = vshrl.u32 %v211, 16
        %v848 = vrot.slane %v846, 4
        %v849 = vor.u32 %v848, %v844
        %v850 = vrot.slane %v849, 4
        %v852 = vshll.u32 %v212, 16
        %v854 = vrot.slane %v852, 5
        %v855 = vsel %vm663, %v850, %v854
        %s856 = scalar_lea.vmem %s1, 2
        %v857 = vld [vmem:[%s856] sm:$0x3]
        %v858 = vunpack.c.l.b16 %v677
        %v859 = vunpack.c.l.b16 %v687
        %v860 = vunpack.c.l.b16 %v701
        %v861 = vunpack.c.l.b16 %v711
        %v862 = vunpack.c.l.b16 %v725
        %v863 = vunpack.c.l.b16 %v735
        %v864 = vunpack.c.l.b16 %v749
        %v865 = vunpack.c.l.b16 %v759
        %v866 = vunpack.c.l.b16 %v773
        %v867 = vunpack.c.l.b16 %v783
        %v868 = vunpack.c.l.b16 %v797
        %v869 = vunpack.c.l.b16 %v807
        %v870 = vunpack.c.l.b16 %v821
        %v871 = vunpack.c.l.b16 %v831
        %v872 = vunpack.c.l.b16 %v845
        %v873 = vunpack.c.l.b16 %v855
        %v874 = vpack.c.b16 %v859, %v858
        %v875 = vpack.c.b16 %v861, %v860
        %v876 = vpack.c.b16 %v863, %v862
        %v877 = vpack.c.b16 %v865, %v864
        %v878 = vpack.c.b16 %v867, %v866
        %v879 = vpack.c.b16 %v869, %v868
        %v880 = vpack.c.b16 %v871, %v870
        %v881 = vpack.c.b16 %v873, %v872
        %v883 = vsel %vm267, %v874, 0
        %v886 = vsel %vm267, %v875, 0
        %v889 = vsel %vm267, %v876, 0
        %v892 = vsel %vm267, %v877, 0
        %v895 = vsel %vm267, %v878, 0
        %v898 = vsel %vm267, %v879, 0
        %v901 = vsel %vm267, %v880, 0
        %v904 = vsel %vm267, %v881, 0
        %v907 = vsel %vm292, %v857, 0
        %909 = vmatprep.subr.bf16.mxu0 0
        %910 = vmatpush1.bf16.msra.mxu0 0
        %911 = vmatprep.subr.bf16.mxu0 0
        %912 = vmatpush1.bf16.msra.mxu0 0
        %913 = vmatprep.subr.bf16.mxu0 0
        %914 = vmatpush1.bf16.msra.mxu0 0
        %915 = vmatprep.subr.bf16.mxu0 0
        %916 = vmatpush1.bf16.msra.mxu0 0
        %917 = vmatprep.subr.bf16.mxu0 0
        %918 = vmatpush1.bf16.msra.mxu0 0
        %919 = vmatprep.subr.bf16.mxu0 0
        %920 = vmatpush1.bf16.msra.mxu0 0
        %921 = vmatprep.subr.bf16.mxu0 0
        %922 = vmatpush1.bf16.msra.mxu0 0
        %923 = vmatprep.subr.bf16.mxu0 0
        %924 = vmatpush1.bf16.msra.mxu0 %v907
        %925 = vmatprep.subr.bf16.mxu0 0
        %926 = vmatpush2.bf16.msra.mxu0 0
        %927 = vmatprep.subr.bf16.mxu0 0
        %928 = vmatpush2.bf16.msra.mxu0 0
        %929 = vmatprep.subr.bf16.mxu0 0
        %930 = vmatpush2.bf16.msra.mxu0 0
        %931 = vmatprep.subr.bf16.mxu0 0
        %932 = vmatpush2.bf16.msra.mxu0 0
        %933 = vmatprep.subr.bf16.mxu0 0
        %934 = vmatpush2.bf16.msra.mxu0 0
        %935 = vmatprep.subr.bf16.mxu0 0
        %936 = vmatpush2.bf16.msra.mxu0 0
        %937 = vmatprep.subr.bf16.mxu0 0
        %938 = vmatpush2.bf16.msra.mxu0 0
        %939 = vmatprep.subr.bf16.mxu0 0
        %940 = vmatpush2.bf16.msra.mxu0 0
        %941 = vmatprep.mubr.bf16.mxu0 0
        %942 = vmatmul.mubr.bf16.gmra.mxu0 %v883
        %v943 = vpop.f32.mrf.mxu0
        %v944 = vadd.f32 0.0, %v943
        %v945 = vpop.f32.mrf.mxu0
        %v946 = vpop.f32.mrf.mxu0
        %v947 = vadd.f32 0.0, %v946
        %v948 = vpop.f32.mrf.mxu0
        %949 = vmatprep.mubr.bf16.mxu0 0
        %950 = vmatmul.mubr.bf16.gmra.mxu0 %v886
        %v951 = vpop.f32.mrf.mxu0
        %v952 = vadd.f32 0.0, %v951
        %v953 = vpop.f32.mrf.mxu0
        %v954 = vpop.f32.mrf.mxu0
        %v955 = vadd.f32 0.0, %v954
        %v956 = vpop.f32.mrf.mxu0
        %957 = vmatprep.mubr.bf16.mxu0 0
        %958 = vmatmul.mubr.bf16.gmra.mxu0 %v889
        %v959 = vpop.f32.mrf.mxu0
        %v960 = vadd.f32 0.0, %v959
        %v961 = vpop.f32.mrf.mxu0
        %v962 = vpop.f32.mrf.mxu0
        %v963 = vadd.f32 0.0, %v962
        %v964 = vpop.f32.mrf.mxu0
        %965 = vmatprep.mubr.bf16.mxu0 0
        %966 = vmatmul.mubr.bf16.gmra.mxu0 %v892
        %v967 = vpop.f32.mrf.mxu0
        %v968 = vadd.f32 0.0, %v967
        %v969 = vpop.f32.mrf.mxu0
        %v970 = vpop.f32.mrf.mxu0
        %v971 = vadd.f32 0.0, %v970
        %v972 = vpop.f32.mrf.mxu0
        %973 = vmatprep.mubr.bf16.mxu0 0
        %974 = vmatmul.mubr.bf16.gmra.mxu0 %v895
        %v975 = vpop.f32.mrf.mxu0
        %v976 = vadd.f32 0.0, %v975
        %v977 = vpop.f32.mrf.mxu0
        %v978 = vpop.f32.mrf.mxu0
        %v979 = vadd.f32 0.0, %v978
        %v980 = vpop.f32.mrf.mxu0
        %981 = vmatprep.mubr.bf16.mxu0 0
        %982 = vmatmul.mubr.bf16.gmra.mxu0 %v898
        %v983 = vpop.f32.mrf.mxu0
        %v984 = vadd.f32 0.0, %v983
        %v985 = vpop.f32.mrf.mxu0
        %v986 = vpop.f32.mrf.mxu0
        %v987 = vadd.f32 0.0, %v986
        %v988 = vpop.f32.mrf.mxu0
        %989 = vmatprep.mubr.bf16.mxu0 0
        %990 = vmatmul.mubr.bf16.gmra.mxu0 %v901
        %v991 = vpop.f32.mrf.mxu0
        %v992 = vadd.f32 0.0, %v991
        %v993 = vpop.f32.mrf.mxu0
        %v994 = vpop.f32.mrf.mxu0
        %v995 = vadd.f32 0.0, %v994
        %v996 = vpop.f32.mrf.mxu0
        %997 = vmatprep.mubr.bf16.mxu0 0
        %998 = vmatmul.mubr.bf16.gmra.mxu0 %v904
        %v999 = vpop.f32.mrf.mxu0
        %v1000 = vadd.f32 0.0, %v999
        %v1001 = vpop.f32.mrf.mxu0
        %v1002 = vpop.f32.mrf.mxu0
        %v1003 = vadd.f32 0.0, %v1002
        %v1004 = vpop.f32.mrf.mxu0
        %1005 = vdwg.mxu0
        %v1006 = vadd.f32 %v645, %v944
        %v1007 = vadd.f32 %v646, %v947
        %v1008 = vadd.f32 %v647, %v952
        %v1009 = vadd.f32 %v648, %v955
        %v1010 = vadd.f32 %v649, %v960
        %v1011 = vadd.f32 %v650, %v963
        %v1012 = vadd.f32 %v651, %v968
        %v1013 = vadd.f32 %v652, %v971
        %v1014 = vadd.f32 %v653, %v976
        %v1015 = vadd.f32 %v654, %v979
        %v1016 = vadd.f32 %v655, %v984
        %v1017 = vadd.f32 %v656, %v987
        %v1018 = vadd.f32 %v657, %v992
        %v1019 = vadd.f32 %v658, %v995
        %v1020 = vadd.f32 %v659, %v1000
        %v1021 = vadd.f32 %v660, %v1003
        %v1023 = vshrl.u32 %v213, 16
        %v1025 = vrot.slane %v1023, 4
        %v1026 = vshll.u32 %v213, 16
        %v1028 = vrot.slane %v1026, 5
        %v1029 = vor.u32 %v1025, %v1028
        %v1030 = vrot.slane %v1029, 4
        %v1032 = vshll.u32 %v214, 16
        %v1034 = vrot.slane %v1032, 5
        %v1035 = vsel %vm663, %v1030, %v1034
        %v1036 = vshrl.u32 %v214, 16
        %v1038 = vrot.slane %v1036, 4
        %v1039 = vor.u32 %v1038, %v1034
        %v1040 = vrot.slane %v1039, 4
        %v1042 = vshll.u32 %v215, 16
        %v1044 = vrot.slane %v1042, 5
        %v1045 = vsel %vm663, %v1040, %v1044
        %s1046 = scalar_lea.vmem %s1, 8
        %v1047 = vld [vmem:[%s1046] sm:$0x3]
        %v1048 = vunpack.c.l.b16 %v1035
        %v1049 = vunpack.c.l.b16 %v1045
        %v1050 = vpack.c.b16 %v1049, %v1048
        %v1052 = vsel %vm267, %v1050, 0
        %v1055 = vsel %vm292, %v1047, 0
        %1057 = vmatprep.subr.bf16.mxu0 0
        %1058 = vmatpush1.bf16.msra.mxu0 0
        %1059 = vmatprep.subr.bf16.mxu0 0
        %1060 = vmatpush1.bf16.msra.mxu0 0
        %1061 = vmatprep.subr.bf16.mxu0 0
        %1062 = vmatpush1.bf16.msra.mxu0 0
        %1063 = vmatprep.subr.bf16.mxu0 0
        %1064 = vmatpush1.bf16.msra.mxu0 0
        %1065 = vmatprep.subr.bf16.mxu0 0
        %1066 = vmatpush1.bf16.msra.mxu0 0
        %1067 = vmatprep.subr.bf16.mxu0 0
        %1068 = vmatpush1.bf16.msra.mxu0 0
        %1069 = vmatprep.subr.bf16.mxu0 0
        %1070 = vmatpush1.bf16.msra.mxu0 0
        %1071 = vmatprep.subr.bf16.mxu0 0
        %1072 = vmatpush1.bf16.msra.mxu0 %v1055
        %1073 = vmatprep.subr.bf16.mxu0 0
        %1074 = vmatpush2.bf16.msra.mxu0 0
        %1075 = vmatprep.subr.bf16.mxu0 0
        %1076 = vmatpush2.bf16.msra.mxu0 0
        %1077 = vmatprep.subr.bf16.mxu0 0
        %1078 = vmatpush2.bf16.msra.mxu0 0
        %1079 = vmatprep.subr.bf16.mxu0 0
        %1080 = vmatpush2.bf16.msra.mxu0 0
        %1081 = vmatprep.subr.bf16.mxu0 0
        %1082 = vmatpush2.bf16.msra.mxu0 0
        %1083 = vmatprep.subr.bf16.mxu0 0
        %1084 = vmatpush2.bf16.msra.mxu0 0
        %1085 = vmatprep.subr.bf16.mxu0 0
        %1086 = vmatpush2.bf16.msra.mxu0 0
        %1087 = vmatprep.subr.bf16.mxu0 0
        %1088 = vmatpush2.bf16.msra.mxu0 0
        %1089 = vmatprep.mubr.bf16.mxu0 0
        %1090 = vmatmul.mubr.bf16.gmra.mxu0 %v886
        %v1091 = vpop.f32.mrf.mxu0
        %v1092 = vadd.f32 0.0, %v1091
        %v1093 = vpop.f32.mrf.mxu0
        %v1094 = vpop.f32.mrf.mxu0
        %v1095 = vadd.f32 0.0, %v1094
        %v1096 = vpop.f32.mrf.mxu0
        %1097 = vmatprep.mubr.bf16.mxu0 0
        %1098 = vmatmul.mubr.bf16.gmra.mxu0 %v889
        %v1099 = vpop.f32.mrf.mxu0
        %v1100 = vadd.f32 0.0, %v1099
        %v1101 = vpop.f32.mrf.mxu0
        %v1102 = vpop.f32.mrf.mxu0
        %v1103 = vadd.f32 0.0, %v1102
        %v1104 = vpop.f32.mrf.mxu0
        %1105 = vmatprep.mubr.bf16.mxu0 0
        %1106 = vmatmul.mubr.bf16.gmra.mxu0 %v892
        %v1107 = vpop.f32.mrf.mxu0
        %v1108 = vadd.f32 0.0, %v1107
        %v1109 = vpop.f32.mrf.mxu0
        %v1110 = vpop.f32.mrf.mxu0
        %v1111 = vadd.f32 0.0, %v1110
        %v1112 = vpop.f32.mrf.mxu0
        %1113 = vmatprep.mubr.bf16.mxu0 0
        %1114 = vmatmul.mubr.bf16.gmra.mxu0 %v895
        %v1115 = vpop.f32.mrf.mxu0
        %v1116 = vadd.f32 0.0, %v1115
        %v1117 = vpop.f32.mrf.mxu0
        %v1118 = vpop.f32.mrf.mxu0
        %v1119 = vadd.f32 0.0, %v1118
        %v1120 = vpop.f32.mrf.mxu0
        %1121 = vmatprep.mubr.bf16.mxu0 0
        %1122 = vmatmul.mubr.bf16.gmra.mxu0 %v898
        %v1123 = vpop.f32.mrf.mxu0
        %v1124 = vadd.f32 0.0, %v1123
        %v1125 = vpop.f32.mrf.mxu0
        %v1126 = vpop.f32.mrf.mxu0
        %v1127 = vadd.f32 0.0, %v1126
        %v1128 = vpop.f32.mrf.mxu0
        %1129 = vmatprep.mubr.bf16.mxu0 0
        %1130 = vmatmul.mubr.bf16.gmra.mxu0 %v901
        %v1131 = vpop.f32.mrf.mxu0
        %v1132 = vadd.f32 0.0, %v1131
        %v1133 = vpop.f32.mrf.mxu0
        %v1134 = vpop.f32.mrf.mxu0
        %v1135 = vadd.f32 0.0, %v1134
        %v1136 = vpop.f32.mrf.mxu0
        %1137 = vmatprep.mubr.bf16.mxu0 0
        %1138 = vmatmul.mubr.bf16.gmra.mxu0 %v904
        %v1139 = vpop.f32.mrf.mxu0
        %v1140 = vadd.f32 0.0, %v1139
        %v1141 = vpop.f32.mrf.mxu0
        %v1142 = vpop.f32.mrf.mxu0
        %v1143 = vadd.f32 0.0, %v1142
        %v1144 = vpop.f32.mrf.mxu0
        %1145 = vmatprep.mubr.bf16.mxu0 0
        %1146 = vmatmul.mubr.bf16.gmra.mxu0 %v1052
        %v1147 = vpop.f32.mrf.mxu0
        %v1148 = vadd.f32 0.0, %v1147
        %v1149 = vpop.f32.mrf.mxu0
        %v1150 = vpop.f32.mrf.mxu0
        %v1151 = vadd.f32 0.0, %v1150
        %v1152 = vpop.f32.mrf.mxu0
        %1153 = vdwg.mxu0
        %v1154 = vadd.f32 %v1006, %v1092
        %v1155 = vadd.f32 %v1007, %v1095
        %v1156 = vadd.f32 %v1008, %v1100
        %v1157 = vadd.f32 %v1009, %v1103
        %v1158 = vadd.f32 %v1010, %v1108
        %v1159 = vadd.f32 %v1011, %v1111
        %v1160 = vadd.f32 %v1012, %v1116
        %v1161 = vadd.f32 %v1013, %v1119
        %v1162 = vadd.f32 %v1014, %v1124
        %v1163 = vadd.f32 %v1015, %v1127
        %v1164 = vadd.f32 %v1016, %v1132
        %v1165 = vadd.f32 %v1017, %v1135
        %v1166 = vadd.f32 %v1018, %v1140
        %v1167 = vadd.f32 %v1019, %v1143
        %v1168 = vadd.f32 %v1020, %v1148
        %v1169 = vadd.f32 %v1021, %v1151
        %v1171 = vshrl.u32 %v216, 16
        %v1173 = vrot.slane %v1171, 4
        %v1174 = vshll.u32 %v216, 16
        %v1176 = vrot.slane %v1174, 5
        %v1177 = vor.u32 %v1173, %v1176
        %v1178 = vrot.slane %v1177, 4
        %v1180 = vshll.u32 %v217, 16
        %v1182 = vrot.slane %v1180, 5
        %v1183 = vsel %vm663, %v1178, %v1182
        %v1184 = vshrl.u32 %v217, 16
        %v1186 = vrot.slane %v1184, 4
        %v1187 = vor.u32 %v1186, %v1182
        %v1188 = vrot.slane %v1187, 4
        %v1190 = vshll.u32 %v218, 16
        %v1192 = vrot.slane %v1190, 5
        %v1193 = vsel %vm663, %v1188, %v1192
        %s1194 = scalar_lea.vmem %s1, 14
        %v1195 = vld [vmem:[%s1194] sm:$0x3]
        %v1196 = vunpack.c.l.b16 %v1183
        %v1197 = vunpack.c.l.b16 %v1193
        %v1198 = vpack.c.b16 %v1197, %v1196
        %v1200 = vsel %vm267, %v1198, 0
        %v1203 = vsel %vm292, %v1195, 0
        %1205 = vmatprep.subr.bf16.mxu0 0
        %1206 = vmatpush1.bf16.msra.mxu0 0
        %1207 = vmatprep.subr.bf16.mxu0 0
        %1208 = vmatpush1.bf16.msra.mxu0 0
        %1209 = vmatprep.subr.bf16.mxu0 0
        %1210 = vmatpush1.bf16.msra.mxu0 0
        %1211 = vmatprep.subr.bf16.mxu0 0
        %1212 = vmatpush1.bf16.msra.mxu0 0
        %1213 = vmatprep.subr.bf16.mxu0 0
        %1214 = vmatpush1.bf16.msra.mxu0 0
        %1215 = vmatprep.subr.bf16.mxu0 0
        %1216 = vmatpush1.bf16.msra.mxu0 0
        %1217 = vmatprep.subr.bf16.mxu0 0
        %1218 = vmatpush1.bf16.msra.mxu0 0
        %1219 = vmatprep.subr.bf16.mxu0 0
        %1220 = vmatpush1.bf16.msra.mxu0 %v1203
        %1221 = vmatprep.subr.bf16.mxu0 0
        %1222 = vmatpush2.bf16.msra.mxu0 0
        %1223 = vmatprep.subr.bf16.mxu0 0
        %1224 = vmatpush2.bf16.msra.mxu0 0
        %1225 = vmatprep.subr.bf16.mxu0 0
        %1226 = vmatpush2.bf16.msra.mxu0 0
        %1227 = vmatprep.subr.bf16.mxu0 0
        %1228 = vmatpush2.bf16.msra.mxu0 0
        %1229 = vmatprep.subr.bf16.mxu0 0
        %1230 = vmatpush2.bf16.msra.mxu0 0
        %1231 = vmatprep.subr.bf16.mxu0 0
        %1232 = vmatpush2.bf16.msra.mxu0 0
        %1233 = vmatprep.subr.bf16.mxu0 0
        %1234 = vmatpush2.bf16.msra.mxu0 0
        %1235 = vmatprep.subr.bf16.mxu0 0
        %1236 = vmatpush2.bf16.msra.mxu0 0
        %1237 = vmatprep.mubr.bf16.mxu0 0
        %1238 = vmatmul.mubr.bf16.gmra.mxu0 %v889
        %v1239 = vpop.f32.mrf.mxu0
        %v1240 = vadd.f32 0.0, %v1239
        %v1241 = vpop.f32.mrf.mxu0
        %v1242 = vpop.f32.mrf.mxu0
        %v1243 = vadd.f32 0.0, %v1242
        %v1244 = vpop.f32.mrf.mxu0
        %1245 = vmatprep.mubr.bf16.mxu0 0
        %1246 = vmatmul.mubr.bf16.gmra.mxu0 %v892
        %v1247 = vpop.f32.mrf.mxu0
        %v1248 = vadd.f32 0.0, %v1247
        %v1249 = vpop.f32.mrf.mxu0
        %v1250 = vpop.f32.mrf.mxu0
        %v1251 = vadd.f32 0.0, %v1250
        %v1252 = vpop.f32.mrf.mxu0
        %1253 = vmatprep.mubr.bf16.mxu0 0
        %1254 = vmatmul.mubr.bf16.gmra.mxu0 %v895
        %v1255 = vpop.f32.mrf.mxu0
        %v1256 = vadd.f32 0.0, %v1255
        %v1257 = vpop.f32.mrf.mxu0
        %v1258 = vpop.f32.mrf.mxu0
        %v1259 = vadd.f32 0.0, %v1258
        %v1260 = vpop.f32.mrf.mxu0
        %1261 = vmatprep.mubr.bf16.mxu0 0
        %1262 = vmatmul.mubr.bf16.gmra.mxu0 %v898
        %v1263 = vpop.f32.mrf.mxu0
        %v1264 = vadd.f32 0.0, %v1263
        %v1265 = vpop.f32.mrf.mxu0
        %v1266 = vpop.f32.mrf.mxu0
        %v1267 = vadd.f32 0.0, %v1266
        %v1268 = vpop.f32.mrf.mxu0
        %1269 = vmatprep.mubr.bf16.mxu0 0
        %1270 = vmatmul.mubr.bf16.gmra.mxu0 %v901
        %v1271 = vpop.f32.mrf.mxu0
        %v1272 = vadd.f32 0.0, %v1271
        %v1273 = vpop.f32.mrf.mxu0
        %v1274 = vpop.f32.mrf.mxu0
        %v1275 = vadd.f32 0.0, %v1274
        %v1276 = vpop.f32.mrf.mxu0
        %1277 = vmatprep.mubr.bf16.mxu0 0
        %1278 = vmatmul.mubr.bf16.gmra.mxu0 %v904
        %v1279 = vpop.f32.mrf.mxu0
        %v1280 = vadd.f32 0.0, %v1279
        %v1281 = vpop.f32.mrf.mxu0
        %v1282 = vpop.f32.mrf.mxu0
        %v1283 = vadd.f32 0.0, %v1282
        %v1284 = vpop.f32.mrf.mxu0
        %1285 = vmatprep.mubr.bf16.mxu0 0
        %1286 = vmatmul.mubr.bf16.gmra.mxu0 %v1052
        %v1287 = vpop.f32.mrf.mxu0
        %v1288 = vadd.f32 0.0, %v1287
        %v1289 = vpop.f32.mrf.mxu0
        %v1290 = vpop.f32.mrf.mxu0
        %v1291 = vadd.f32 0.0, %v1290
        %v1292 = vpop.f32.mrf.mxu0
        %1293 = vmatprep.mubr.bf16.mxu0 0
        %1294 = vmatmul.mubr.bf16.gmra.mxu0 %v1200
        %v1295 = vpop.f32.mrf.mxu0
        %v1296 = vadd.f32 0.0, %v1295
        %v1297 = vpop.f32.mrf.mxu0
        %v1298 = vpop.f32.mrf.mxu0
        %v1299 = vadd.f32 0.0, %v1298
        %v1300 = vpop.f32.mrf.mxu0
        %1301 = vdwg.mxu0
        %v1302 = vadd.f32 %v1154, %v1240
        %v1303 = vadd.f32 %v1155, %v1243
        %v1304 = vadd.f32 %v1156, %v1248
        %v1305 = vadd.f32 %v1157, %v1251
        %v1306 = vadd.f32 %v1158, %v1256
        %v1307 = vadd.f32 %v1159, %v1259
        %v1308 = vadd.f32 %v1160, %v1264
        %v1309 = vadd.f32 %v1161, %v1267
        %v1310 = vadd.f32 %v1162, %v1272
        %v1311 = vadd.f32 %v1163, %v1275
        %v1312 = vadd.f32 %v1164, %v1280
        %v1313 = vadd.f32 %v1165, %v1283
        %v1314 = vadd.f32 %v1166, %v1288
        %v1315 = vadd.f32 %v1167, %v1291
        %v1316 = vadd.f32 %v1168, %v1296
        %v1317 = vadd.f32 %v1169, %v1299
        %vm1326 = vcmask 1042432
        %vm1327 = vcmask 1046532
        %vm1328 = vmor %vm1326, %vm1327
        %v1329 = vrot.slane %v189, 5
        %v1330 = vrot.slane %v1329, 4
        %v1331 = vrot.slane %v190, 5
        %v1332 = vsel %vm1328, %v1330, %v1331
        %v1333 = vrot.slane %v1331, 4
        %v1334 = vrot.slane %v191, 5
        %v1335 = vsel %vm1328, %v1333, %v1334
        %v1336 = vrot.slane %v192, 5
        %v1337 = vrot.slane %v1336, 4
        %v1338 = vrot.slane %v193, 5
        %v1339 = vsel %vm1328, %v1337, %v1338
        %v1340 = vrot.slane %v1338, 4
        %v1341 = vrot.slane %v194, 5
        %v1342 = vsel %vm1328, %v1340, %v1341
        %v1343 = vrot.slane %v195, 5
        %v1344 = vrot.slane %v1343, 4
        %v1345 = vrot.slane %v196, 5
        %v1346 = vsel %vm1328, %v1344, %v1345
        %v1347 = vrot.slane %v1345, 4
        %v1348 = vrot.slane %v197, 5
        %v1349 = vsel %vm1328, %v1347, %v1348
        %v1350 = vrot.slane %v198, 5
        %v1351 = vrot.slane %v1350, 4
        %v1352 = vrot.slane %v199, 5
        %v1353 = vsel %vm1328, %v1351, %v1352
        %v1354 = vrot.slane %v1352, 4
        %v1355 = vrot.slane %v200, 5
        %v1356 = vsel %vm1328, %v1354, %v1355
        %v1357 = vrot.slane %v201, 5
        %v1358 = vrot.slane %v1357, 4
        %v1359 = vrot.slane %v202, 5
        %v1360 = vsel %vm1328, %v1358, %v1359
        %v1361 = vrot.slane %v1359, 4
        %v1362 = vrot.slane %v203, 5
        %v1363 = vsel %vm1328, %v1361, %v1362
        %v1364 = vrot.slane %v204, 5
        %v1365 = vrot.slane %v1364, 4
        %v1366 = vrot.slane %v205, 5
        %v1367 = vsel %vm1328, %v1365, %v1366
        %v1368 = vrot.slane %v1366, 4
        %v1369 = vrot.slane %v206, 5
        %v1370 = vsel %vm1328, %v1368, %v1369
        %v1371 = vrot.slane %v207, 5
        %v1372 = vrot.slane %v1371, 4
        %v1373 = vrot.slane %v208, 5
        %v1374 = vsel %vm1328, %v1372, %v1373
        %v1375 = vrot.slane %v1373, 4
        %v1376 = vrot.slane %v209, 5
        %v1377 = vsel %vm1328, %v1375, %v1376
        %v1378 = vrot.slane %v210, 5
        %v1379 = vrot.slane %v1378, 4
        %v1380 = vrot.slane %v211, 5
        %v1381 = vsel %vm1328, %v1379, %v1380
        %v1382 = vrot.slane %v1380, 4
        %v1383 = vrot.slane %v212, 5
        %v1384 = vsel %vm1328, %v1382, %v1383
        %s1385 = scalar_lea.vmem %s1, 4
        %v1386 = vld [vmem:[%s1385] sm:$0x3]
        %v1387 = vunpack.c.l.b16 %v1332
        %v1388 = vunpack.c.l.b16 %v1335
        %v1389 = vunpack.c.l.b16 %v1339
        %v1390 = vunpack.c.l.b16 %v1342
        %v1391 = vunpack.c.l.b16 %v1346
        %v1392 = vunpack.c.l.b16 %v1349
        %v1393 = vunpack.c.l.b16 %v1353
        %v1394 = vunpack.c.l.b16 %v1356
        %v1395 = vunpack.c.l.b16 %v1360
        %v1396 = vunpack.c.l.b16 %v1363
        %v1397 = vunpack.c.l.b16 %v1367
        %v1398 = vunpack.c.l.b16 %v1370
        %v1399 = vunpack.c.l.b16 %v1374
        %v1400 = vunpack.c.l.b16 %v1377
        %v1401 = vunpack.c.l.b16 %v1381
        %v1402 = vunpack.c.l.b16 %v1384
        %v1403 = vpack.c.b16 %v1388, %v1387
        %v1404 = vpack.c.b16 %v1390, %v1389
        %v1405 = vpack.c.b16 %v1392, %v1391
        %v1406 = vpack.c.b16 %v1394, %v1393
        %v1407 = vpack.c.b16 %v1396, %v1395
        %v1408 = vpack.c.b16 %v1398, %v1397
        %v1409 = vpack.c.b16 %v1400, %v1399
        %v1410 = vpack.c.b16 %v1402, %v1401
        %v1412 = vsel %vm267, %v1403, 0
        %v1415 = vsel %vm267, %v1404, 0
        %v1418 = vsel %vm267, %v1405, 0
        %v1421 = vsel %vm267, %v1406, 0
        %v1424 = vsel %vm267, %v1407, 0
        %v1427 = vsel %vm267, %v1408, 0
        %v1430 = vsel %vm267, %v1409, 0
        %v1433 = vsel %vm267, %v1410, 0
        %v1436 = vsel %vm292, %v1386, 0
        %1438 = vmatprep.subr.bf16.mxu0 0
        %1439 = vmatpush1.bf16.msra.mxu0 0
        %1440 = vmatprep.subr.bf16.mxu0 0
        %1441 = vmatpush1.bf16.msra.mxu0 0
        %1442 = vmatprep.subr.bf16.mxu0 0
        %1443 = vmatpush1.bf16.msra.mxu0 0
        %1444 = vmatprep.subr.bf16.mxu0 0
        %1445 = vmatpush1.bf16.msra.mxu0 0
        %1446 = vmatprep.subr.bf16.mxu0 0
        %1447 = vmatpush1.bf16.msra.mxu0 0
        %1448 = vmatprep.subr.bf16.mxu0 0
        %1449 = vmatpush1.bf16.msra.mxu0 0
        %1450 = vmatprep.subr.bf16.mxu0 0
        %1451 = vmatpush1.bf16.msra.mxu0 0
        %1452 = vmatprep.subr.bf16.mxu0 0
        %1453 = vmatpush1.bf16.msra.mxu0 %v1436
        %1454 = vmatprep.subr.bf16.mxu0 0
        %1455 = vmatpush2.bf16.msra.mxu0 0
        %1456 = vmatprep.subr.bf16.mxu0 0
        %1457 = vmatpush2.bf16.msra.mxu0 0
        %1458 = vmatprep.subr.bf16.mxu0 0
        %1459 = vmatpush2.bf16.msra.mxu0 0
        %1460 = vmatprep.subr.bf16.mxu0 0
        %1461 = vmatpush2.bf16.msra.mxu0 0
        %1462 = vmatprep.subr.bf16.mxu0 0
        %1463 = vmatpush2.bf16.msra.mxu0 0
        %1464 = vmatprep.subr.bf16.mxu0 0
        %1465 = vmatpush2.bf16.msra.mxu0 0
        %1466 = vmatprep.subr.bf16.mxu0 0
        %1467 = vmatpush2.bf16.msra.mxu0 0
        %1468 = vmatprep.subr.bf16.mxu0 0
        %1469 = vmatpush2.bf16.msra.mxu0 0
        %1470 = vmatprep.mubr.bf16.mxu0 0
        %1471 = vmatmul.mubr.bf16.gmra.mxu0 %v1412
        %v1472 = vpop.f32.mrf.mxu0
        %v1473 = vadd.f32 0.0, %v1472
        %v1474 = vpop.f32.mrf.mxu0
        %v1475 = vpop.f32.mrf.mxu0
        %v1476 = vadd.f32 0.0, %v1475
        %v1477 = vpop.f32.mrf.mxu0
        %1478 = vmatprep.mubr.bf16.mxu0 0
        %1479 = vmatmul.mubr.bf16.gmra.mxu0 %v1415
        %v1480 = vpop.f32.mrf.mxu0
        %v1481 = vadd.f32 0.0, %v1480
        %v1482 = vpop.f32.mrf.mxu0
        %v1483 = vpop.f32.mrf.mxu0
        %v1484 = vadd.f32 0.0, %v1483
        %v1485 = vpop.f32.mrf.mxu0
        %1486 = vmatprep.mubr.bf16.mxu0 0
        %1487 = vmatmul.mubr.bf16.gmra.mxu0 %v1418
        %v1488 = vpop.f32.mrf.mxu0
        %v1489 = vadd.f32 0.0, %v1488
        %v1490 = vpop.f32.mrf.mxu0
        %v1491 = vpop.f32.mrf.mxu0
        %v1492 = vadd.f32 0.0, %v1491
        %v1493 = vpop.f32.mrf.mxu0
        %1494 = vmatprep.mubr.bf16.mxu0 0
        %1495 = vmatmul.mubr.bf16.gmra.mxu0 %v1421
        %v1496 = vpop.f32.mrf.mxu0
        %v1497 = vadd.f32 0.0, %v1496
        %v1498 = vpop.f32.mrf.mxu0
        %v1499 = vpop.f32.mrf.mxu0
        %v1500 = vadd.f32 0.0, %v1499
        %v1501 = vpop.f32.mrf.mxu0
        %1502 = vmatprep.mubr.bf16.mxu0 0
        %1503 = vmatmul.mubr.bf16.gmra.mxu0 %v1424
        %v1504 = vpop.f32.mrf.mxu0
        %v1505 = vadd.f32 0.0, %v1504
        %v1506 = vpop.f32.mrf.mxu0
        %v1507 = vpop.f32.mrf.mxu0
        %v1508 = vadd.f32 0.0, %v1507
        %v1509 = vpop.f32.mrf.mxu0
        %1510 = vmatprep.mubr.bf16.mxu0 0
        %1511 = vmatmul.mubr.bf16.gmra.mxu0 %v1427
        %v1512 = vpop.f32.mrf.mxu0
        %v1513 = vadd.f32 0.0, %v1512
        %v1514 = vpop.f32.mrf.mxu0
        %v1515 = vpop.f32.mrf.mxu0
        %v1516 = vadd.f32 0.0, %v1515
        %v1517 = vpop.f32.mrf.mxu0
        %1518 = vmatprep.mubr.bf16.mxu0 0
        %1519 = vmatmul.mubr.bf16.gmra.mxu0 %v1430
        %v1520 = vpop.f32.mrf.mxu0
        %v1521 = vadd.f32 0.0, %v1520
        %v1522 = vpop.f32.mrf.mxu0
        %v1523 = vpop.f32.mrf.mxu0
        %v1524 = vadd.f32 0.0, %v1523
        %v1525 = vpop.f32.mrf.mxu0
        %1526 = vmatprep.mubr.bf16.mxu0 0
        %1527 = vmatmul.mubr.bf16.gmra.mxu0 %v1433
        %v1528 = vpop.f32.mrf.mxu0
        %v1529 = vadd.f32 0.0, %v1528
        %v1530 = vpop.f32.mrf.mxu0
        %v1531 = vpop.f32.mrf.mxu0
        %v1532 = vadd.f32 0.0, %v1531
        %v1533 = vpop.f32.mrf.mxu0
        %1534 = vdwg.mxu0
        %v1535 = vadd.f32 %v1302, %v1473
        %v1536 = vadd.f32 %v1303, %v1476
        %v1537 = vadd.f32 %v1304, %v1481
        %v1538 = vadd.f32 %v1305, %v1484
        %v1539 = vadd.f32 %v1306, %v1489
        %v1540 = vadd.f32 %v1307, %v1492
        %v1541 = vadd.f32 %v1308, %v1497
        %v1542 = vadd.f32 %v1309, %v1500
        %v1543 = vadd.f32 %v1310, %v1505
        %v1544 = vadd.f32 %v1311, %v1508
        %v1545 = vadd.f32 %v1312, %v1513
        %v1546 = vadd.f32 %v1313, %v1516
        %v1547 = vadd.f32 %v1314, %v1521
        %v1548 = vadd.f32 %v1315, %v1524
        %v1549 = vadd.f32 %v1316, %v1529
        %v1550 = vadd.f32 %v1317, %v1532
        %v1552 = vrot.slane %v213, 5
        %v1553 = vrot.slane %v1552, 4
        %v1554 = vrot.slane %v214, 5
        %v1555 = vsel %vm1328, %v1553, %v1554
        %v1556 = vrot.slane %v1554, 4
        %v1557 = vrot.slane %v215, 5
        %v1558 = vsel %vm1328, %v1556, %v1557
        %s1559 = scalar_lea.vmem %s1, 10
        %v1560 = vld [vmem:[%s1559] sm:$0x3]
        %v1561 = vunpack.c.l.b16 %v1555
        %v1562 = vunpack.c.l.b16 %v1558
        %v1563 = vpack.c.b16 %v1562, %v1561
        %v1565 = vsel %vm267, %v1563, 0
        %v1568 = vsel %vm292, %v1560, 0
        %1570 = vmatprep.subr.bf16.mxu0 0
        %1571 = vmatpush1.bf16.msra.mxu0 0
        %1572 = vmatprep.subr.bf16.mxu0 0
        %1573 = vmatpush1.bf16.msra.mxu0 0
        %1574 = vmatprep.subr.bf16.mxu0 0
        %1575 = vmatpush1.bf16.msra.mxu0 0
        %1576 = vmatprep.subr.bf16.mxu0 0
        %1577 = vmatpush1.bf16.msra.mxu0 0
        %1578 = vmatprep.subr.bf16.mxu0 0
        %1579 = vmatpush1.bf16.msra.mxu0 0
        %1580 = vmatprep.subr.bf16.mxu0 0
        %1581 = vmatpush1.bf16.msra.mxu0 0
        %1582 = vmatprep.subr.bf16.mxu0 0
        %1583 = vmatpush1.bf16.msra.mxu0 0
        %1584 = vmatprep.subr.bf16.mxu0 0
        %1585 = vmatpush1.bf16.msra.mxu0 %v1568
        %1586 = vmatprep.subr.bf16.mxu0 0
        %1587 = vmatpush2.bf16.msra.mxu0 0
        %1588 = vmatprep.subr.bf16.mxu0 0
        %1589 = vmatpush2.bf16.msra.mxu0 0
        %1590 = vmatprep.subr.bf16.mxu0 0
        %1591 = vmatpush2.bf16.msra.mxu0 0
        %1592 = vmatprep.subr.bf16.mxu0 0
        %1593 = vmatpush2.bf16.msra.mxu0 0
        %1594 = vmatprep.subr.bf16.mxu0 0
        %1595 = vmatpush2.bf16.msra.mxu0 0
        %1596 = vmatprep.subr.bf16.mxu0 0
        %1597 = vmatpush2.bf16.msra.mxu0 0
        %1598 = vmatprep.subr.bf16.mxu0 0
        %1599 = vmatpush2.bf16.msra.mxu0 0
        %1600 = vmatprep.subr.bf16.mxu0 0
        %1601 = vmatpush2.bf16.msra.mxu0 0
        %1602 = vmatprep.mubr.bf16.mxu0 0
        %1603 = vmatmul.mubr.bf16.gmra.mxu0 %v1415
        %v1604 = vpop.f32.mrf.mxu0
        %v1605 = vadd.f32 0.0, %v1604
        %v1606 = vpop.f32.mrf.mxu0
        %v1607 = vpop.f32.mrf.mxu0
        %v1608 = vadd.f32 0.0, %v1607
        %v1609 = vpop.f32.mrf.mxu0
        %1610 = vmatprep.mubr.bf16.mxu0 0
        %1611 = vmatmul.mubr.bf16.gmra.mxu0 %v1418
        %v1612 = vpop.f32.mrf.mxu0
        %v1613 = vadd.f32 0.0, %v1612
        %v1614 = vpop.f32.mrf.mxu0
        %v1615 = vpop.f32.mrf.mxu0
        %v1616 = vadd.f32 0.0, %v1615
        %v1617 = vpop.f32.mrf.mxu0
        %1618 = vmatprep.mubr.bf16.mxu0 0
        %1619 = vmatmul.mubr.bf16.gmra.mxu0 %v1421
        %v1620 = vpop.f32.mrf.mxu0
        %v1621 = vadd.f32 0.0, %v1620
        %v1622 = vpop.f32.mrf.mxu0
        %v1623 = vpop.f32.mrf.mxu0
        %v1624 = vadd.f32 0.0, %v1623
        %v1625 = vpop.f32.mrf.mxu0
        %1626 = vmatprep.mubr.bf16.mxu0 0
        %1627 = vmatmul.mubr.bf16.gmra.mxu0 %v1424
        %v1628 = vpop.f32.mrf.mxu0
        %v1629 = vadd.f32 0.0, %v1628
        %v1630 = vpop.f32.mrf.mxu0
        %v1631 = vpop.f32.mrf.mxu0
        %v1632 = vadd.f32 0.0, %v1631
        %v1633 = vpop.f32.mrf.mxu0
        %1634 = vmatprep.mubr.bf16.mxu0 0
        %1635 = vmatmul.mubr.bf16.gmra.mxu0 %v1427
        %v1636 = vpop.f32.mrf.mxu0
        %v1637 = vadd.f32 0.0, %v1636
        %v1638 = vpop.f32.mrf.mxu0
        %v1639 = vpop.f32.mrf.mxu0
        %v1640 = vadd.f32 0.0, %v1639
        %v1641 = vpop.f32.mrf.mxu0
        %1642 = vmatprep.mubr.bf16.mxu0 0
        %1643 = vmatmul.mubr.bf16.gmra.mxu0 %v1430
        %v1644 = vpop.f32.mrf.mxu0
        %v1645 = vadd.f32 0.0, %v1644
        %v1646 = vpop.f32.mrf.mxu0
        %v1647 = vpop.f32.mrf.mxu0
        %v1648 = vadd.f32 0.0, %v1647
        %v1649 = vpop.f32.mrf.mxu0
        %1650 = vmatprep.mubr.bf16.mxu0 0
        %1651 = vmatmul.mubr.bf16.gmra.mxu0 %v1433
        %v1652 = vpop.f32.mrf.mxu0
        %v1653 = vadd.f32 0.0, %v1652
        %v1654 = vpop.f32.mrf.mxu0
        %v1655 = vpop.f32.mrf.mxu0
        %v1656 = vadd.f32 0.0, %v1655
        %v1657 = vpop.f32.mrf.mxu0
        %1658 = vmatprep.mubr.bf16.mxu0 0
        %1659 = vmatmul.mubr.bf16.gmra.mxu0 %v1565
        %v1660 = vpop.f32.mrf.mxu0
        %v1661 = vadd.f32 0.0, %v1660
        %v1662 = vpop.f32.mrf.mxu0
        %v1663 = vpop.f32.mrf.mxu0
        %v1664 = vadd.f32 0.0, %v1663
        %v1665 = vpop.f32.mrf.mxu0
        %1666 = vdwg.mxu0
        %v1667 = vadd.f32 %v1535, %v1605
        %v1668 = vadd.f32 %v1536, %v1608
        %v1669 = vadd.f32 %v1537, %v1613
        %v1670 = vadd.f32 %v1538, %v1616
        %v1671 = vadd.f32 %v1539, %v1621
        %v1672 = vadd.f32 %v1540, %v1624
        %v1673 = vadd.f32 %v1541, %v1629
        %v1674 = vadd.f32 %v1542, %v1632
        %v1675 = vadd.f32 %v1543, %v1637
        %v1676 = vadd.f32 %v1544, %v1640
        %v1677 = vadd.f32 %v1545, %v1645
        %v1678 = vadd.f32 %v1546, %v1648
        %v1679 = vadd.f32 %v1547, %v1653
        %v1680 = vadd.f32 %v1548, %v1656
        %v1681 = vadd.f32 %v1549, %v1661
        %v1682 = vadd.f32 %v1550, %v1664
        %v1684 = vrot.slane %v216, 5
        %v1685 = vrot.slane %v1684, 4
        %v1686 = vrot.slane %v217, 5
        %v1687 = vsel %vm1328, %v1685, %v1686
        %v1688 = vrot.slane %v1686, 4
        %v1689 = vrot.slane %v218, 5
        %v1690 = vsel %vm1328, %v1688, %v1689
        %s1691 = scalar_lea.vmem %s1, 16
        %v1692 = vld [vmem:[%s1691] sm:$0x3]
        %v1693 = vunpack.c.l.b16 %v1687
        %v1694 = vunpack.c.l.b16 %v1690
        %v1695 = vpack.c.b16 %v1694, %v1693
        %v1697 = vsel %vm267, %v1695, 0
        %v1700 = vsel %vm292, %v1692, 0
        %1702 = vmatprep.subr.bf16.mxu0 0
        %1703 = vmatpush1.bf16.msra.mxu0 0
        %1704 = vmatprep.subr.bf16.mxu0 0
        %1705 = vmatpush1.bf16.msra.mxu0 0
        %1706 = vmatprep.subr.bf16.mxu0 0
        %1707 = vmatpush1.bf16.msra.mxu0 0
        %1708 = vmatprep.subr.bf16.mxu0 0
        %1709 = vmatpush1.bf16.msra.mxu0 0
        %1710 = vmatprep.subr.bf16.mxu0 0
        %1711 = vmatpush1.bf16.msra.mxu0 0
        %1712 = vmatprep.subr.bf16.mxu0 0
        %1713 = vmatpush1.bf16.msra.mxu0 0
        %1714 = vmatprep.subr.bf16.mxu0 0
        %1715 = vmatpush1.bf16.msra.mxu0 0
        %1716 = vmatprep.subr.bf16.mxu0 0
        %1717 = vmatpush1.bf16.msra.mxu0 %v1700
        %1718 = vmatprep.subr.bf16.mxu0 0
        %1719 = vmatpush2.bf16.msra.mxu0 0
        %1720 = vmatprep.subr.bf16.mxu0 0
        %1721 = vmatpush2.bf16.msra.mxu0 0
        %1722 = vmatprep.subr.bf16.mxu0 0
        %1723 = vmatpush2.bf16.msra.mxu0 0
        %1724 = vmatprep.subr.bf16.mxu0 0
        %1725 = vmatpush2.bf16.msra.mxu0 0
        %1726 = vmatprep.subr.bf16.mxu0 0
        %1727 = vmatpush2.bf16.msra.mxu0 0
        %1728 = vmatprep.subr.bf16.mxu0 0
        %1729 = vmatpush2.bf16.msra.mxu0 0
        %1730 = vmatprep.subr.bf16.mxu0 0
        %1731 = vmatpush2.bf16.msra.mxu0 0
        %1732 = vmatprep.subr.bf16.mxu0 0
        %1733 = vmatpush2.bf16.msra.mxu0 0
        %1734 = vmatprep.mubr.bf16.mxu0 0
        %1735 = vmatmul.mubr.bf16.gmra.mxu0 %v1418
        %v1736 = vpop.f32.mrf.mxu0
        %v1737 = vadd.f32 0.0, %v1736
        %v1738 = vpop.f32.mrf.mxu0
        %v1739 = vpop.f32.mrf.mxu0
        %v1740 = vadd.f32 0.0, %v1739
        %v1741 = vpop.f32.mrf.mxu0
        %1742 = vmatprep.mubr.bf16.mxu0 0
        %1743 = vmatmul.mubr.bf16.gmra.mxu0 %v1421
        %v1744 = vpop.f32.mrf.mxu0
        %v1745 = vadd.f32 0.0, %v1744
        %v1746 = vpop.f32.mrf.mxu0
        %v1747 = vpop.f32.mrf.mxu0
        %v1748 = vadd.f32 0.0, %v1747
        %v1749 = vpop.f32.mrf.mxu0
        %1750 = vmatprep.mubr.bf16.mxu0 0
        %1751 = vmatmul.mubr.bf16.gmra.mxu0 %v1424
        %v1752 = vpop.f32.mrf.mxu0
        %v1753 = vadd.f32 0.0, %v1752
        %v1754 = vpop.f32.mrf.mxu0
        %v1755 = vpop.f32.mrf.mxu0
        %v1756 = vadd.f32 0.0, %v1755
        %v1757 = vpop.f32.mrf.mxu0
        %1758 = vmatprep.mubr.bf16.mxu0 0
        %1759 = vmatmul.mubr.bf16.gmra.mxu0 %v1427
        %v1760 = vpop.f32.mrf.mxu0
        %v1761 = vadd.f32 0.0, %v1760
        %v1762 = vpop.f32.mrf.mxu0
        %v1763 = vpop.f32.mrf.mxu0
        %v1764 = vadd.f32 0.0, %v1763
        %v1765 = vpop.f32.mrf.mxu0
        %1766 = vmatprep.mubr.bf16.mxu0 0
        %1767 = vmatmul.mubr.bf16.gmra.mxu0 %v1430
        %v1768 = vpop.f32.mrf.mxu0
        %v1769 = vadd.f32 0.0, %v1768
        %v1770 = vpop.f32.mrf.mxu0
        %v1771 = vpop.f32.mrf.mxu0
        %v1772 = vadd.f32 0.0, %v1771
        %v1773 = vpop.f32.mrf.mxu0
        %1774 = vmatprep.mubr.bf16.mxu0 0
        %1775 = vmatmul.mubr.bf16.gmra.mxu0 %v1433
        %v1776 = vpop.f32.mrf.mxu0
        %v1777 = vadd.f32 0.0, %v1776
        %v1778 = vpop.f32.mrf.mxu0
        %v1779 = vpop.f32.mrf.mxu0
        %v1780 = vadd.f32 0.0, %v1779
        %v1781 = vpop.f32.mrf.mxu0
        %1782 = vmatprep.mubr.bf16.mxu0 0
        %1783 = vmatmul.mubr.bf16.gmra.mxu0 %v1565
        %v1784 = vpop.f32.mrf.mxu0
        %v1785 = vadd.f32 0.0, %v1784
        %v1786 = vpop.f32.mrf.mxu0
        %v1787 = vpop.f32.mrf.mxu0
        %v1788 = vadd.f32 0.0, %v1787
        %v1789 = vpop.f32.mrf.mxu0
        %1790 = vmatprep.mubr.bf16.mxu0 0
        %1791 = vmatmul.mubr.bf16.gmra.mxu0 %v1697
        %v1792 = vpop.f32.mrf.mxu0
        %v1793 = vadd.f32 0.0, %v1792
        %v1794 = vpop.f32.mrf.mxu0
        %v1795 = vpop.f32.mrf.mxu0
        %v1796 = vadd.f32 0.0, %v1795
        %v1797 = vpop.f32.mrf.mxu0
        %1798 = vdwg.mxu0
        %v1799 = vadd.f32 %v1667, %v1737
        %v1800 = vadd.f32 %v1668, %v1740
        %v1801 = vadd.f32 %v1669, %v1745
        %v1802 = vadd.f32 %v1670, %v1748
        %v1803 = vadd.f32 %v1671, %v1753
        %v1804 = vadd.f32 %v1672, %v1756
        %v1805 = vadd.f32 %v1673, %v1761
        %v1806 = vadd.f32 %v1674, %v1764
        %v1807 = vadd.f32 %v1675, %v1769
        %v1808 = vadd.f32 %v1676, %v1772
        %v1809 = vadd.f32 %v1677, %v1777
        %v1810 = vadd.f32 %v1678, %v1780
        %v1811 = vadd.f32 %v1679, %v1785
        %v1812 = vadd.f32 %v1680, %v1788
        %v1813 = vadd.f32 %v1681, %v1793
        %v1814 = vadd.f32 %v1682, %v1796
        %v1815 = vmax.f32 %v1799, 0.0
        %v1816 = vmax.f32 %v1800, 0.0
        %v1817 = vmax.f32 %v1801, 0.0
        %v1818 = vmax.f32 %v1802, 0.0
        %v1819 = vmax.f32 %v1803, 0.0
        %v1820 = vmax.f32 %v1804, 0.0
        %v1821 = vmax.f32 %v1805, 0.0
        %v1822 = vmax.f32 %v1806, 0.0
        %v1823 = vmax.f32 %v1807, 0.0
        %v1824 = vmax.f32 %v1808, 0.0
        %v1825 = vmax.f32 %v1809, 0.0
        %v1826 = vmax.f32 %v1810, 0.0
        %v1827 = vmax.f32 %v1811, 0.0
        %v1828 = vmax.f32 %v1812, 0.0
        %v1829 = vmax.f32 %v1813, 0.0
        %v1830 = vmax.f32 %v1814, 0.0
        %1831 = vst [vmem:[%s177] sm:$0xff] %v1815
        %1832 = vst [vmem:[%s177 + $0x8] sm:$0xff] %v1816
        %1833 = vst [vmem:[%s177 + $0x10] sm:$0xff] %v1817
        %1834 = vst [vmem:[%s177 + $0x18] sm:$0xff] %v1818
        %1835 = vst [vmem:[%s177 + $0x20] sm:$0xff] %v1819
        %1836 = vst [vmem:[%s177 + $0x28] sm:$0xff] %v1820
        %1837 = vst [vmem:[%s177 + $0x30] sm:$0xff] %v1821
        %1838 = vst [vmem:[%s177 + $0x38] sm:$0xff] %v1822
        %1839 = vst [vmem:[%s177 + $0x40] sm:$0xff] %v1823
        %1840 = vst [vmem:[%s177 + $0x48] sm:$0xff] %v1824
        %1841 = vst [vmem:[%s177 + $0x50] sm:$0xff] %v1825
        %1842 = vst [vmem:[%s177 + $0x58] sm:$0xff] %v1826
        %1843 = vst [vmem:[%s177 + $0x60] sm:$0xff] %v1827
        %1844 = vst [vmem:[%s177 + $0x68] sm:$0xff] %v1828
        %1845 = vst [vmem:[%s177 + $0x70] sm:$0xff] %v1829
        %1846 = vst [vmem:[%s177 + $0x78] sm:$0xff] %v1830
        %s1847 = sand.u32 %s107, 1
        %s1848 = scalar_lea.sflag [#allocation3], %s1847
        %s1849 = sand.u32 %s107, 1
        %s1850 = smul.addr %s1849, 128
        %s1851 = scalar_lea.vmem [#allocation2], %s1850
        // Predicated region
        $region33: #{tpu_custom_call.1} parent=31 // pred_check
          %p1852 = pneg %p117
        $region34: #{tpu_custom_call.1} parent=31 // pred_check_branch
          %1854 = sbr.rel (%p1852) target = $region36
        $region35: #{tpu_custom_call.1} parent=31 // pred_region
          %s1855 = smul.u32 8, %s22
          %s1857 = ssub.s32 2048, 2048
          %1858 = vsyncadd %s1848, %s1857
          %s1859 = smul.addr %s1855, 2
          %s1860 = smul.addr %s21, 32
          %s1861 = sadd.s32 %s1859, %s1860
          %s1862 = smul.addr %s1861, 128
          %s1863 = scalar_lea.hbm %s3, %s1862
          %s1864 = sshll.u32 %s1851, 4
          %s1865 = int_to_ptr.vmem [resolvable:$true] %s1864
          %1870 = dma.vmem_to_hbm [thread:$0]  %s1865, 2048, %s1863, %s1848, 128, 128, 8
        $region36: #{tpu_custom_call.1} parent=31 // pred_fallthru
          _
      $region32: #{tpu_custom_call.1} parent=5 // pred_fallthru
        _
      %p1871 = scmp.le.s32.totalorder 2, %s12
      // Predicated region
      $region37: #{tpu_custom_call.1} parent=5 // pred_check
        %p1872 = pneg %p1871
      $region38: #{tpu_custom_call.1} parent=5 // pred_check_branch
        %1874 = sbr.rel (%p1872) target = $region40
      $region39: #{tpu_custom_call.1} parent=5 // pred_region
        %s1875 = ssub.s32 %s12, 2
        // Predicated region
        $region41: #{tpu_custom_call.1} parent=39 // pred_check
          %p1876 = pneg %p123
        $region42: #{tpu_custom_call.1} parent=39 // pred_check_branch
          %1878 = sbr.rel (%p1876) target = $region44
        $region43: #{tpu_custom_call.1} parent=39 // pred_region
          %s1879 = sand.u32 %s108, 1
          %s1880 = scalar_lea.sflag [#allocation3], %s1879
          %s1881 = sand.u32 %s108, 1
          %s1882 = smul.addr %s1881, 128
          %s1883 = scalar_lea.vmem [#allocation2], %s1882
          %1884 = dma.done %s1880, 2048
        $region44: #{tpu_custom_call.1} parent=39 // pred_fallthru
          _
      $region40: #{tpu_custom_call.1} parent=5 // pred_fallthru
        _
    $region6: #{tpu_custom_call.1} parent=1 // loop_footer
      %s16 = sadd.s32 1, %s12
    $region7: #{tpu_custom_call.1} parent=1 // loop_footer_branch
      %11 = sbr.rel target = $region3
    $region8: #{tpu_custom_call.1} parent=1 // loop_exit
      _
    %1885 = vsyncpa [#allocation3], 1
    %s1886 = scalar_lea.sflag [#allocation3], 1
    %1887 = vsyncpa %s1886, 1

</llo_original>
